<compile_context>
chip_gen: v6e
topology: v6e:2x2x1
jax: 0.10.0
libtpu: 0.0.40
codegen_flags: <defaults>
</compile_context>

<pallas_src>
import functools
import math

import jax
import jax.numpy as jnp
from jax.experimental import pallas as pl
from jax.experimental.pallas import tpu as pltpu


# ---------------------------------------------------------------------------
# Pallas kernel: GEMM + bias + (optional 2x2-max over column groups) + act
# ---------------------------------------------------------------------------
def _gemm_bias_act_kernel(w_ref, cols_ref, b_ref, o_ref, *, n_win, act):
    """o = act( max_q( W @ cols[q] + b ) ).

    w_ref:    (C_out, K)            -- conv weights as a matrix
    cols_ref: (n_win, K, bm)        -- im2col columns; n_win=4 fuses MaxPool2d
    b_ref:    (C_out, 1)            -- bias
    o_ref:    (C_out, bm)           -- lane-dense output tile
    """
    w = w_ref[...]
    b = b_ref[...]
    out = None
    for q in range(n_win):  # static unroll (n_win is 1 or 4)
        z = jnp.dot(w, cols_ref[q], preferred_element_type=jnp.float32) + b
        out = z if out is None else jnp.maximum(out, z)
    if act == "relu":
        out = jnp.maximum(out, 0.0)
    elif act == "tanh":
        out = jnp.tanh(out)
    o_ref[...] = out.astype(o_ref.dtype)


def _pick_block_m(m, cap=2048):
    """Largest multiple of 128 that divides m (capped), else the full dim."""
    for cand in range(cap, 127, -128):
        if m % cand == 0:
            return cand
    return m


def _conv_gemm(w2d, cols, bias, act, n_win):
    """Run the fused GEMM kernel.  cols: (n_win, K, M) -> out (C_out, M)."""
    c_out, k = w2d.shape
    _, _, m = cols.shape
    bm = _pick_block_m(m)
    grid = (m // bm,)
    kernel = functools.partial(_gemm_bias_act_kernel, n_win=n_win, act=act)
    return pl.pallas_call(
        kernel,
        out_shape=jax.ShapeDtypeStruct((c_out, m), jnp.float32),
        grid_spec=pltpu.PrefetchScalarGridSpec(
            num_scalar_prefetch=0,
            grid=grid,
            in_specs=[
                pl.BlockSpec((c_out, k), lambda i: (0, 0)),          # weights (resident)
                pl.BlockSpec((n_win, k, bm), lambda i: (0, 0, i)),   # im2col tile
                pl.BlockSpec((c_out, 1), lambda i: (0, 0)),          # bias
            ],
            out_specs=pl.BlockSpec((c_out, bm), lambda i: (0, i)),   # lane-dense out
        ),
        compiler_params=pltpu.CompilerParams(
            dimension_semantics=("parallel",),
            vmem_limit_bytes=32 * 1024 * 1024,
        ),
    )(w2d.astype(jnp.float32), cols.astype(jnp.float32),
      bias.astype(jnp.float32).reshape(c_out, 1))


# ---------------------------------------------------------------------------
# Layer wrappers (plain-JAX layout glue around the Pallas GEMM kernel)
# ---------------------------------------------------------------------------
def _im2col_3x3(x):
    """x: (B, C, H, W) -> patches (B, C, 9, H, W) for a 3x3 / pad=1 conv."""
    b, c, h, w = x.shape
    xp = jnp.pad(x, ((0, 0), (0, 0), (1, 1), (1, 1)))
    taps = [xp[:, :, ky:ky + h, kx:kx + w] for ky in range(3) for kx in range(3)]
    return jnp.stack(taps, axis=2)


def conv3x3(x, w, bias, act="relu", pool=False):
    """Conv2d(k=3, s=1, p=1) [+ ReLU] [+ fused MaxPool2d(2,2)], NCHW in/out."""
    b, cin, h, wdt = x.shape
    cout = w.shape[0]
    w2d = w.reshape(cout, cin * 9)
    patches = _im2col_3x3(x)                               # (B, Cin, 9, H, W)
    if pool:
        hp, wp = h // 2, wdt // 2
        # group im2col columns by 2x2 pool-window member (py, px)
        p6 = patches.reshape(b, cin, 9, hp, 2, wp, 2)      # (B,Cin,9,yp,py,xp,px)
        cols = p6.transpose(4, 6, 1, 2, 0, 3, 5)           # (py,px,Cin,9,B,yp,xp)
        cols = cols.reshape(4, cin * 9, b * hp * wp)
        out = _conv_gemm(w2d, cols, bias, act, n_win=4)    # (Cout, B*hp*wp)
        return out.reshape(cout, b, hp, wp).transpose(1, 0, 2, 3)
    cols = patches.transpose(1, 2, 0, 3, 4).reshape(1, cin * 9, b * h * wdt)
    out = _conv_gemm(w2d, cols, bias, act, n_win=1)        # (Cout, B*H*W)
    return out.reshape(cout, b, h, wdt).transpose(1, 0, 2, 3)


def conv_transpose4x4_s2(x, wt, bias, act="relu"):
    """ConvTranspose2d(Cin, Cout, k=4, s=2, p=1) + act, via dense sub-pixel conv.

    wt: PyTorch layout (Cin, Cout, 4, 4).  Equivalent to a 3x3 conv (pad 1)
    producing 4*Cout channels (one group per output sub-pixel) + pixel-shuffle.
    """
    b, cin, h, w = x.shape
    cout = wt.shape[1]
    # For output pixel oy = 2*yp + py: input offset dy maps to ConvT tap ky.
    ky_map = {0: {-1: 3, 0: 1}, 1: {0: 2, 1: 0}}
    w3 = jnp.zeros((4 * cout, cin, 3, 3), jnp.float32)
    for py in (0, 1):
        for px in (0, 1):
            r0 = (py * 2 + px) * cout
            for dy, ky in ky_map[py].items():
                for dx, kx in ky_map[px].items():
                    blk = wt[:, :, ky, kx].T               # (Cout, Cin)
                    w3 = w3.at[r0:r0 + cout, :, dy + 1, dx + 1].set(blk)
    bias4 = jnp.tile(bias, 4)                              # channel order (py,px,co)
    y = conv3x3(x, w3, bias4, act=act, pool=False)         # (B, 4*Cout, H, W)
    # pixel shuffle: out[b, co, 2*yp+py, 2*xp+px] = y[b, (py,px,co), yp, xp]
    y = y.reshape(b, 2, 2, cout, h, w)
    y = y.transpose(0, 3, 4, 1, 5, 2).reshape(b, cout, 2 * h, 2 * w)
    return y


def autoencoder_cnn_forward(x, p):
    """Forward pass of AutoEncoder_CNN, NCHW float32 in / out."""
    # encoder
    h = conv3x3(x, p["w1"], p["b1"], act="relu", pool=True)     # (B,16,H/2,W/2)
    h = conv3x3(h, p["w2"], p["b2"], act="relu", pool=True)     # (B, 8,H/4,W/4)
    # decoder
    h = conv_transpose4x4_s2(h, p["wt1"], p["bt1"], act="relu")  # (B,16,H/2,W/2)
    h = conv_transpose4x4_s2(h, p["wt2"], p["bt2"], act="relu")  # (B, 8,H,  W)
    h = conv3x3(h, p["w3"], p["b3"], act="tanh", pool=False)     # (B, 1,H,  W)
    return h


# ---------------------------------------------------------------------------
# Pure-JAX reference (for in-script correctness check)
# ---------------------------------------------------------------------------
def _ref_conv(x, w, b, pad):
    y = jax.lax.conv_general_dilated(
        x, w, (1, 1), ((pad, pad), (pad, pad)),
        dimension_numbers=("NCHW", "OIHW", "NCHW"),
        precision=jax.lax.Precision.HIGHEST)
    return y + b.reshape(1, -1, 1, 1)


def _ref_convT(x, wt, b):
    w = jnp.flip(wt, (2, 3)).transpose(1, 0, 2, 3)       # (Cout, Cin, 4, 4)
    y = jax.lax.conv_general_dilated(
        x, w, (1, 1), ((2, 2), (2, 2)), lhs_dilation=(2, 2),
        dimension_numbers=("NCHW", "OIHW", "NCHW"),
        precision=jax.lax.Precision.HIGHEST)
    return y + b.reshape(1, -1, 1, 1)


def _ref_pool(x):
    b, c, h, w = x.shape
    return x.reshape(b, c, h // 2, 2, w // 2, 2).max(axis=(3, 5))


def reference_forward(x, p):
    h = _ref_pool(jax.nn.relu(_ref_conv(x, p["w1"], p["b1"], 1)))
    h = _ref_pool(jax.nn.relu(_ref_conv(h, p["w2"], p["b2"], 1)))
    h = jax.nn.relu(_ref_convT(h, p["wt1"], p["bt1"]))
    h = jax.nn.relu(_ref_convT(h, p["wt2"], p["bt2"]))
    h = jnp.tanh(_ref_conv(h, p["w3"], p["b3"], 1))
    return h


# ---------------------------------------------------------------------------
# main
# ---------------------------------------------------------------------------
if __name__ == "__main__":
    key = jax.random.PRNGKey(0)
    ks = jax.random.split(key, 11)

    def u(k, shape, fan_in):
        bound = 1.0 / math.sqrt(fan_in)
        return jax.random.uniform(k, shape, jnp.float32, -bound, bound)

    params = {
        "w1": u(ks[0], (16, 1, 3, 3), 1 * 9),    "b1": u(ks[1], (16,), 1 * 9),
        "w2": u(ks[2], (8, 16, 3, 3), 16 * 9),   "b2": u(ks[3], (8,), 16 * 9),
        "wt1": u(ks[4], (8, 16, 4, 4), 8 * 16),  "bt1": u(ks[5], (16,), 8 * 16),
        "wt2": u(ks[6], (16, 8, 4, 4), 16 * 16), "bt2": u(ks[7], (8,), 16 * 16),
        "w3": u(ks[8], (1, 8, 3, 3), 8 * 9),     "b3": u(ks[9], (1,), 8 * 9),
    }
    # NCHW input, 1 channel (as the module requires), spatial divisible by 4.
    x = jax.random.normal(ks[10], (2, 1, 16, 16), jnp.float32)

    y = jax.jit(autoencoder_cnn_forward)(x, params)
    y = jax.block_until_ready(y)
    assert y.shape == x.shape, y.shape

    y_ref = reference_forward(x, params)
    if not jnp.allclose(y, y_ref, rtol=2e-2, atol=2e-2):
        max_err = float(jnp.max(jnp.abs(y - y_ref)))
        raise AssertionError(f"Pallas output mismatch vs reference, max|err|={max_err}")

    print("KERNEL_OK")
</pallas_src>

<mosaic_0001>
module attributes {stable_mosaic.version = 11 : i64} {
  func.func @_gemm_bias_act_kernel(%arg0: i32, %arg1: memref<16x9xf32, #tpu.memory_space<vmem>>, %arg2: memref<4x9x128xf32, #tpu.memory_space<vmem>>, %arg3: memref<16x1xf32, #tpu.memory_space<vmem>>, %arg4: memref<16x128xf32, #tpu.memory_space<vmem>>) attributes {dimension_semantics = [#tpu.dimension_semantics<parallel>], iteration_bounds = array<i64: 1>, scalar_prefetch = 0 : i64, scratch_operands = 0 : i64, tpu.core_type = #tpu.core_type<tc>, window_params = [{pipeline_mode = #tpu.pipeline_mode<synchronous>, transform_indices = @transform_0, window_bounds = array<i64: 16, 9>}, {transform_indices = @transform_1, window_bounds = array<i64: 4, 9, 128>}, {pipeline_mode = #tpu.pipeline_mode<synchronous>, transform_indices = @transform_2, window_bounds = array<i64: 16, 1>}, {transform_indices = @transform_3, window_bounds = array<i64: 16, 128>}]} {
    %c0 = arith.constant 0 : index
    %c0_0 = arith.constant 0 : index
    %0 = vector.load %arg1[%c0, %c0_0] : memref<16x9xf32, #tpu.memory_space<vmem>>, vector<16x9xf32>
    %c0_1 = arith.constant 0 : index
    %c0_2 = arith.constant 0 : index
    %1 = vector.load %arg3[%c0_1, %c0_2] : memref<16x1xf32, #tpu.memory_space<vmem>>, vector<16x1xf32>
    %c0_3 = arith.constant 0 : index
    %c0_4 = arith.constant 0 : index
    %c0_5 = arith.constant 0 : index
    %2 = vector.load %arg2[%c0_3, %c0_4, %c0_5] : memref<4x9x128xf32, #tpu.memory_space<vmem>>, vector<1x9x128xf32>
    %3 = vector.shape_cast %2 : vector<1x9x128xf32> to vector<9x128xf32>
    %cst = arith.constant dense<0.000000e+00> : vector<16x128xf32>
    %4 = tpu.matmul %0, %3, %cst {dimension_numbers = #tpu.dot_dimension_numbers<[1], [0], [0], [1], [0, 0, 1, 1], [], []>} : vector<16x9xf32>, vector<9x128xf32>, vector<16x128xf32> -> vector<16x128xf32>
    %5 = vector.broadcast %1 : vector<16x1xf32> to vector<16x128xf32>
    %6 = arith.addf %4, %5 : vector<16x128xf32>
    %c1 = arith.constant 1 : index
    %c0_6 = arith.constant 0 : index
    %c0_7 = arith.constant 0 : index
    %7 = vector.load %arg2[%c1, %c0_6, %c0_7] : memref<4x9x128xf32, #tpu.memory_space<vmem>>, vector<1x9x128xf32>
    %8 = vector.shape_cast %7 : vector<1x9x128xf32> to vector<9x128xf32>
    %cst_8 = arith.constant dense<0.000000e+00> : vector<16x128xf32>
    %9 = tpu.matmul %0, %8, %cst_8 {dimension_numbers = #tpu.dot_dimension_numbers<[1], [0], [0], [1], [0, 0, 1, 1], [], []>} : vector<16x9xf32>, vector<9x128xf32>, vector<16x128xf32> -> vector<16x128xf32>
    %10 = vector.broadcast %1 : vector<16x1xf32> to vector<16x128xf32>
    %11 = arith.addf %9, %10 : vector<16x128xf32>
    %12 = arith.maximumf %6, %11 : vector<16x128xf32>
    %c2 = arith.constant 2 : index
    %c0_9 = arith.constant 0 : index
    %c0_10 = arith.constant 0 : index
    %13 = vector.load %arg2[%c2, %c0_9, %c0_10] : memref<4x9x128xf32, #tpu.memory_space<vmem>>, vector<1x9x128xf32>
    %14 = vector.shape_cast %13 : vector<1x9x128xf32> to vector<9x128xf32>
    %cst_11 = arith.constant dense<0.000000e+00> : vector<16x128xf32>
    %15 = tpu.matmul %0, %14, %cst_11 {dimension_numbers = #tpu.dot_dimension_numbers<[1], [0], [0], [1], [0, 0, 1, 1], [], []>} : vector<16x9xf32>, vector<9x128xf32>, vector<16x128xf32> -> vector<16x128xf32>
    %16 = vector.broadcast %1 : vector<16x1xf32> to vector<16x128xf32>
    %17 = arith.addf %15, %16 : vector<16x128xf32>
    %18 = arith.maximumf %12, %17 : vector<16x128xf32>
    %c3 = arith.constant 3 : index
    %c0_12 = arith.constant 0 : index
    %c0_13 = arith.constant 0 : index
    %19 = vector.load %arg2[%c3, %c0_12, %c0_13] : memref<4x9x128xf32, #tpu.memory_space<vmem>>, vector<1x9x128xf32>
    %20 = vector.shape_cast %19 : vector<1x9x128xf32> to vector<9x128xf32>
    %cst_14 = arith.constant dense<0.000000e+00> : vector<16x128xf32>
    %21 = tpu.matmul %0, %20, %cst_14 {dimension_numbers = #tpu.dot_dimension_numbers<[1], [0], [0], [1], [0, 0, 1, 1], [], []>} : vector<16x9xf32>, vector<9x128xf32>, vector<16x128xf32> -> vector<16x128xf32>
    %22 = vector.broadcast %1 : vector<16x1xf32> to vector<16x128xf32>
    %23 = arith.addf %21, %22 : vector<16x128xf32>
    %24 = arith.maximumf %18, %23 : vector<16x128xf32>
    %cst_15 = arith.constant 0.000000e+00 : f32
    %25 = vector.broadcast %cst_15 : f32 to vector<16x128xf32>
    %26 = arith.maximumf %24, %25 : vector<16x128xf32>
    %c0_16 = arith.constant 0 : index
    %c0_17 = arith.constant 0 : index
    %27 = vector.load %arg4[%c0_16, %c0_17] : memref<16x128xf32, #tpu.memory_space<vmem>>, vector<16x128xf32>
    tpu.vector_store %arg4[%c0_16, %c0_17], %26 {strides = array<i32>} : memref<16x128xf32, #tpu.memory_space<vmem>>, vector<16x128xf32>,
    return
  }
  func.func @transform_0(%arg0: i32) -> (i32, i32) {
    %c0_i32 = arith.constant 0 : i32
    %c0_i32_0 = arith.constant 0 : i32
    %c0_i32_1 = arith.constant 0 : i32
    return %c0_i32, %c0_i32_0 : i32, i32
  }
  func.func @transform_1(%arg0: i32) -> (i32, i32, i32) {
    %c0_i32 = arith.constant 0 : i32
    %c0_i32_0 = arith.constant 0 : i32
    %c0_i32_1 = arith.constant 0 : i32
    return %c0_i32, %c0_i32_0, %arg0 : i32, i32, i32
  }
  func.func @transform_2(%arg0: i32) -> (i32, i32) {
    %c0_i32 = arith.constant 0 : i32
    %c0_i32_0 = arith.constant 0 : i32
    %c0_i32_1 = arith.constant 0 : i32
    return %c0_i32, %c0_i32_0 : i32, i32
  }
  func.func @transform_3(%arg0: i32) -> (i32, i32) {
    %c0_i32 = arith.constant 0 : i32
    %c0_i32_0 = arith.constant 0 : i32
    return %c0_i32, %arg0 : i32, i32
  }
}

module attributes {stable_mosaic.version = 11 : i64} {
  func.func @_gemm_bias_act_kernel(%arg0: i32, %arg1: memref<8x144xf32, #tpu.memory_space<vmem>>, %arg2: memref<4x144x32xf32, #tpu.memory_space<vmem>>, %arg3: memref<8x1xf32, #tpu.memory_space<vmem>>, %arg4: memref<8x32xf32, #tpu.memory_space<vmem>>) attributes {dimension_semantics = [#tpu.dimension_semantics<parallel>], iteration_bounds = array<i64: 1>, scalar_prefetch = 0 : i64, scratch_operands = 0 : i64, tpu.core_type = #tpu.core_type<tc>, window_params = [{pipeline_mode = #tpu.pipeline_mode<synchronous>, transform_indices = @transform_0, window_bounds = array<i64: 8, 144>}, {transform_indices = @transform_1, window_bounds = array<i64: 4, 144, 32>}, {pipeline_mode = #tpu.pipeline_mode<synchronous>, transform_indices = @transform_2, window_bounds = array<i64: 8, 1>}, {transform_indices = @transform_3, window_bounds = array<i64: 8, 32>}]} {
    %c0 = arith.constant 0 : index
    %c0_0 = arith.constant 0 : index
    %0 = vector.load %arg1[%c0, %c0_0] : memref<8x144xf32, #tpu.memory_space<vmem>>, vector<8x144xf32>
    %c0_1 = arith.constant 0 : index
    %c0_2 = arith.constant 0 : index
    %1 = vector.load %arg3[%c0_1, %c0_2] : memref<8x1xf32, #tpu.memory_space<vmem>>, vector<8x1xf32>
    %c0_3 = arith.constant 0 : index
    %c0_4 = arith.constant 0 : index
    %c0_5 = arith.constant 0 : index
    %2 = vector.load %arg2[%c0_3, %c0_4, %c0_5] : memref<4x144x32xf32, #tpu.memory_space<vmem>>, vector<1x144x32xf32>
    %3 = vector.shape_cast %2 : vector<1x144x32xf32> to vector<144x32xf32>
    %cst = arith.constant dense<0.000000e+00> : vector<8x32xf32>
    %4 = tpu.matmul %0, %3, %cst {dimension_numbers = #tpu.dot_dimension_numbers<[1], [0], [0], [1], [0, 0, 1, 1], [], []>} : vector<8x144xf32>, vector<144x32xf32>, vector<8x32xf32> -> vector<8x32xf32>
    %5 = vector.broadcast %1 : vector<8x1xf32> to vector<8x32xf32>
    %6 = arith.addf %4, %5 : vector<8x32xf32>
    %c1 = arith.constant 1 : index
    %c0_6 = arith.constant 0 : index
    %c0_7 = arith.constant 0 : index
    %7 = vector.load %arg2[%c1, %c0_6, %c0_7] : memref<4x144x32xf32, #tpu.memory_space<vmem>>, vector<1x144x32xf32>
    %8 = vector.shape_cast %7 : vector<1x144x32xf32> to vector<144x32xf32>
    %cst_8 = arith.constant dense<0.000000e+00> : vector<8x32xf32>
    %9 = tpu.matmul %0, %8, %cst_8 {dimension_numbers = #tpu.dot_dimension_numbers<[1], [0], [0], [1], [0, 0, 1, 1], [], []>} : vector<8x144xf32>, vector<144x32xf32>, vector<8x32xf32> -> vector<8x32xf32>
    %10 = vector.broadcast %1 : vector<8x1xf32> to vector<8x32xf32>
    %11 = arith.addf %9, %10 : vector<8x32xf32>
    %12 = arith.maximumf %6, %11 : vector<8x32xf32>
    %c2 = arith.constant 2 : index
    %c0_9 = arith.constant 0 : index
    %c0_10 = arith.constant 0 : index
    %13 = vector.load %arg2[%c2, %c0_9, %c0_10] : memref<4x144x32xf32, #tpu.memory_space<vmem>>, vector<1x144x32xf32>
    %14 = vector.shape_cast %13 : vector<1x144x32xf32> to vector<144x32xf32>
    %cst_11 = arith.constant dense<0.000000e+00> : vector<8x32xf32>
    %15 = tpu.matmul %0, %14, %cst_11 {dimension_numbers = #tpu.dot_dimension_numbers<[1], [0], [0], [1], [0, 0, 1, 1], [], []>} : vector<8x144xf32>, vector<144x32xf32>, vector<8x32xf32> -> vector<8x32xf32>
    %16 = vector.broadcast %1 : vector<8x1xf32> to vector<8x32xf32>
    %17 = arith.addf %15, %16 : vector<8x32xf32>
    %18 = arith.maximumf %12, %17 : vector<8x32xf32>
    %c3 = arith.constant 3 : index
    %c0_12 = arith.constant 0 : index
    %c0_13 = arith.constant 0 : index
    %19 = vector.load %arg2[%c3, %c0_12, %c0_13] : memref<4x144x32xf32, #tpu.memory_space<vmem>>, vector<1x144x32xf32>
    %20 = vector.shape_cast %19 : vector<1x144x32xf32> to vector<144x32xf32>
    %cst_14 = arith.constant dense<0.000000e+00> : vector<8x32xf32>
    %21 = tpu.matmul %0, %20, %cst_14 {dimension_numbers = #tpu.dot_dimension_numbers<[1], [0], [0], [1], [0, 0, 1, 1], [], []>} : vector<8x144xf32>, vector<144x32xf32>, vector<8x32xf32> -> vector<8x32xf32>
    %22 = vector.broadcast %1 : vector<8x1xf32> to vector<8x32xf32>
    %23 = arith.addf %21, %22 : vector<8x32xf32>
    %24 = arith.maximumf %18, %23 : vector<8x32xf32>
    %cst_15 = arith.constant 0.000000e+00 : f32
    %25 = vector.broadcast %cst_15 : f32 to vector<8x32xf32>
    %26 = arith.maximumf %24, %25 : vector<8x32xf32>
    %c0_16 = arith.constant 0 : index
    %c0_17 = arith.constant 0 : index
    %27 = vector.load %arg4[%c0_16, %c0_17] : memref<8x32xf32, #tpu.memory_space<vmem>>, vector<8x32xf32>
    tpu.vector_store %arg4[%c0_16, %c0_17], %26 {strides = array<i32>} : memref<8x32xf32, #tpu.memory_space<vmem>>, vector<8x32xf32>,
    return
  }
  func.func @transform_0(%arg0: i32) -> (i32, i32) {
    %c0_i32 = arith.constant 0 : i32
    %c0_i32_0 = arith.constant 0 : i32
    %c0_i32_1 = arith.constant 0 : i32
    return %c0_i32, %c0_i32_0 : i32, i32
  }
  func.func @transform_1(%arg0: i32) -> (i32, i32, i32) {
    %c0_i32 = arith.constant 0 : i32
    %c0_i32_0 = arith.constant 0 : i32
    %c0_i32_1 = arith.constant 0 : i32
    return %c0_i32, %c0_i32_0, %arg0 : i32, i32, i32
  }
  func.func @transform_2(%arg0: i32) -> (i32, i32) {
    %c0_i32 = arith.constant 0 : i32
    %c0_i32_0 = arith.constant 0 : i32
    %c0_i32_1 = arith.constant 0 : i32
    return %c0_i32, %c0_i32_0 : i32, i32
  }
  func.func @transform_3(%arg0: i32) -> (i32, i32) {
    %c0_i32 = arith.constant 0 : i32
    %c0_i32_0 = arith.constant 0 : i32
    return %c0_i32, %arg0 : i32, i32
  }
}

module attributes {stable_mosaic.version = 11 : i64} {
  func.func @_gemm_bias_act_kernel(%arg0: i32, %arg1: memref<64x72xf32, #tpu.memory_space<vmem>>, %arg2: memref<1x72x32xf32, #tpu.memory_space<vmem>>, %arg3: memref<64x1xf32, #tpu.memory_space<vmem>>, %arg4: memref<64x32xf32, #tpu.memory_space<vmem>>) attributes {dimension_semantics = [#tpu.dimension_semantics<parallel>], iteration_bounds = array<i64: 1>, scalar_prefetch = 0 : i64, scratch_operands = 0 : i64, tpu.core_type = #tpu.core_type<tc>, window_params = [{pipeline_mode = #tpu.pipeline_mode<synchronous>, transform_indices = @transform_0, window_bounds = array<i64: 64, 72>}, {transform_indices = @transform_1, window_bounds = array<i64: 1, 72, 32>}, {pipeline_mode = #tpu.pipeline_mode<synchronous>, transform_indices = @transform_2, window_bounds = array<i64: 64, 1>}, {transform_indices = @transform_3, window_bounds = array<i64: 64, 32>}]} {
    %c0 = arith.constant 0 : index
    %c0_0 = arith.constant 0 : index
    %0 = vector.load %arg1[%c0, %c0_0] : memref<64x72xf32, #tpu.memory_space<vmem>>, vector<64x72xf32>
    %c0_1 = arith.constant 0 : index
    %c0_2 = arith.constant 0 : index
    %1 = vector.load %arg3[%c0_1, %c0_2] : memref<64x1xf32, #tpu.memory_space<vmem>>, vector<64x1xf32>
    %c0_3 = arith.constant 0 : index
    %c0_4 = arith.constant 0 : index
    %c0_5 = arith.constant 0 : index
    %2 = vector.load %arg2[%c0_3, %c0_4, %c0_5] : memref<1x72x32xf32, #tpu.memory_space<vmem>>, vector<1x72x32xf32>
    %3 = vector.shape_cast %2 : vector<1x72x32xf32> to vector<72x32xf32>
    %cst = arith.constant dense<0.000000e+00> : vector<64x32xf32>
    %4 = tpu.matmul %0, %3, %cst {dimension_numbers = #tpu.dot_dimension_numbers<[1], [0], [0], [1], [0, 0, 1, 1], [], []>} : vector<64x72xf32>, vector<72x32xf32>, vector<64x32xf32> -> vector<64x32xf32>
    %5 = vector.broadcast %1 : vector<64x1xf32> to vector<64x32xf32>
    %6 = arith.addf %4, %5 : vector<64x32xf32>
    %cst_6 = arith.constant 0.000000e+00 : f32
    %7 = vector.broadcast %cst_6 : f32 to vector<64x32xf32>
    %8 = arith.maximumf %6, %7 : vector<64x32xf32>
    %c0_7 = arith.constant 0 : index
    %c0_8 = arith.constant 0 : index
    %9 = vector.load %arg4[%c0_7, %c0_8] : memref<64x32xf32, #tpu.memory_space<vmem>>, vector<64x32xf32>
    tpu.vector_store %arg4[%c0_7, %c0_8], %8 {strides = array<i32>} : memref<64x32xf32, #tpu.memory_space<vmem>>, vector<64x32xf32>,
    return
  }
  func.func @transform_0(%arg0: i32) -> (i32, i32) {
    %c0_i32 = arith.constant 0 : i32
    %c0_i32_0 = arith.constant 0 : i32
    %c0_i32_1 = arith.constant 0 : i32
    return %c0_i32, %c0_i32_0 : i32, i32
  }
  func.func @transform_1(%arg0: i32) -> (i32, i32, i32) {
    %c0_i32 = arith.constant 0 : i32
    %c0_i32_0 = arith.constant 0 : i32
    %c0_i32_1 = arith.constant 0 : i32
    return %c0_i32, %c0_i32_0, %arg0 : i32, i32, i32
  }
  func.func @transform_2(%arg0: i32) -> (i32, i32) {
    %c0_i32 = arith.constant 0 : i32
    %c0_i32_0 = arith.constant 0 : i32
    %c0_i32_1 = arith.constant 0 : i32
    return %c0_i32, %c0_i32_0 : i32, i32
  }
  func.func @transform_3(%arg0: i32) -> (i32, i32) {
    %c0_i32 = arith.constant 0 : i32
    %c0_i32_0 = arith.constant 0 : i32
    return %c0_i32, %arg0 : i32, i32
  }
}

module attributes {stable_mosaic.version = 11 : i64} {
  func.func @_gemm_bias_act_kernel(%arg0: i32, %arg1: memref<32x144xf32, #tpu.memory_space<vmem>>, %arg2: memref<1x144x128xf32, #tpu.memory_space<vmem>>, %arg3: memref<32x1xf32, #tpu.memory_space<vmem>>, %arg4: memref<32x128xf32, #tpu.memory_space<vmem>>) attributes {dimension_semantics = [#tpu.dimension_semantics<parallel>], iteration_bounds = array<i64: 1>, scalar_prefetch = 0 : i64, scratch_operands = 0 : i64, tpu.core_type = #tpu.core_type<tc>, window_params = [{pipeline_mode = #tpu.pipeline_mode<synchronous>, transform_indices = @transform_0, window_bounds = array<i64: 32, 144>}, {transform_indices = @transform_1, window_bounds = array<i64: 1, 144, 128>}, {pipeline_mode = #tpu.pipeline_mode<synchronous>, transform_indices = @transform_2, window_bounds = array<i64: 32, 1>}, {transform_indices = @transform_3, window_bounds = array<i64: 32, 128>}]} {
    %c0 = arith.constant 0 : index
    %c0_0 = arith.constant 0 : index
    %0 = vector.load %arg1[%c0, %c0_0] : memref<32x144xf32, #tpu.memory_space<vmem>>, vector<32x144xf32>
    %c0_1 = arith.constant 0 : index
    %c0_2 = arith.constant 0 : index
    %1 = vector.load %arg3[%c0_1, %c0_2] : memref<32x1xf32, #tpu.memory_space<vmem>>, vector<32x1xf32>
    %c0_3 = arith.constant 0 : index
    %c0_4 = arith.constant 0 : index
    %c0_5 = arith.constant 0 : index
    %2 = vector.load %arg2[%c0_3, %c0_4, %c0_5] : memref<1x144x128xf32, #tpu.memory_space<vmem>>, vector<1x144x128xf32>
    %3 = vector.shape_cast %2 : vector<1x144x128xf32> to vector<144x128xf32>
    %cst = arith.constant dense<0.000000e+00> : vector<32x128xf32>
    %4 = tpu.matmul %0, %3, %cst {dimension_numbers = #tpu.dot_dimension_numbers<[1], [0], [0], [1], [0, 0, 1, 1], [], []>} : vector<32x144xf32>, vector<144x128xf32>, vector<32x128xf32> -> vector<32x128xf32>
    %5 = vector.broadcast %1 : vector<32x1xf32> to vector<32x128xf32>
    %6 = arith.addf %4, %5 : vector<32x128xf32>
    %cst_6 = arith.constant 0.000000e+00 : f32
    %7 = vector.broadcast %cst_6 : f32 to vector<32x128xf32>
    %8 = arith.maximumf %6, %7 : vector<32x128xf32>
    %c0_7 = arith.constant 0 : index
    %c0_8 = arith.constant 0 : index
    %9 = vector.load %arg4[%c0_7, %c0_8] : memref<32x128xf32, #tpu.memory_space<vmem>>, vector<32x128xf32>
    tpu.vector_store %arg4[%c0_7, %c0_8], %8 {strides = array<i32>} : memref<32x128xf32, #tpu.memory_space<vmem>>, vector<32x128xf32>,
    return
  }
  func.func @transform_0(%arg0: i32) -> (i32, i32) {
    %c0_i32 = arith.constant 0 : i32
    %c0_i32_0 = arith.constant 0 : i32
    %c0_i32_1 = arith.constant 0 : i32
    return %c0_i32, %c0_i32_0 : i32, i32
  }
  func.func @transform_1(%arg0: i32) -> (i32, i32, i32) {
    %c0_i32 = arith.constant 0 : i32
    %c0_i32_0 = arith.constant 0 : i32
    %c0_i32_1 = arith.constant 0 : i32
    return %c0_i32, %c0_i32_0, %arg0 : i32, i32, i32
  }
  func.func @transform_2(%arg0: i32) -> (i32, i32) {
    %c0_i32 = arith.constant 0 : i32
    %c0_i32_0 = arith.constant 0 : i32
    %c0_i32_1 = arith.constant 0 : i32
    return %c0_i32, %c0_i32_0 : i32, i32
  }
  func.func @transform_3(%arg0: i32) -> (i32, i32) {
    %c0_i32 = arith.constant 0 : i32
    %c0_i32_0 = arith.constant 0 : i32
    return %c0_i32, %arg0 : i32, i32
  }
}

module attributes {stable_mosaic.version = 11 : i64} {
  func.func @_gemm_bias_act_kernel(%arg0: i32, %arg1: memref<1x72xf32, #tpu.memory_space<vmem>>, %arg2: memref<1x72x512xf32, #tpu.memory_space<vmem>>, %arg3: memref<1x1xf32, #tpu.memory_space<vmem>>, %arg4: memref<1x512xf32, #tpu.memory_space<vmem>>) attributes {dimension_semantics = [#tpu.dimension_semantics<parallel>], iteration_bounds = array<i64: 1>, scalar_prefetch = 0 : i64, scratch_operands = 0 : i64, tpu.core_type = #tpu.core_type<tc>, window_params = [{pipeline_mode = #tpu.pipeline_mode<synchronous>, transform_indices = @transform_0, window_bounds = array<i64: 1, 72>}, {transform_indices = @transform_1, window_bounds = array<i64: 1, 72, 512>}, {pipeline_mode = #tpu.pipeline_mode<synchronous>, transform_indices = @transform_2, window_bounds = array<i64: 1, 1>}, {transform_indices = @transform_3, window_bounds = array<i64: 1, 512>}]} {
    %c0 = arith.constant 0 : index
    %c0_0 = arith.constant 0 : index
    %0 = vector.load %arg1[%c0, %c0_0] : memref<1x72xf32, #tpu.memory_space<vmem>>, vector<1x72xf32>
    %c0_1 = arith.constant 0 : index
    %c0_2 = arith.constant 0 : index
    %1 = vector.load %arg3[%c0_1, %c0_2] : memref<1x1xf32, #tpu.memory_space<vmem>>, vector<1x1xf32>
    %c0_3 = arith.constant 0 : index
    %c0_4 = arith.constant 0 : index
    %c0_5 = arith.constant 0 : index
    %2 = vector.load %arg2[%c0_3, %c0_4, %c0_5] : memref<1x72x512xf32, #tpu.memory_space<vmem>>, vector<1x72x512xf32>
    %3 = vector.shape_cast %2 : vector<1x72x512xf32> to vector<72x512xf32>
    %cst = arith.constant dense<0.000000e+00> : vector<1x512xf32>
    %4 = tpu.matmul %0, %3, %cst {dimension_numbers = #tpu.dot_dimension_numbers<[1], [0], [0], [1], [0, 0, 1, 1], [], []>} : vector<1x72xf32>, vector<72x512xf32>, vector<1x512xf32> -> vector<1x512xf32>
    %5 = vector.broadcast %1 : vector<1x1xf32> to vector<1x512xf32>
    %6 = arith.addf %4, %5 : vector<1x512xf32>
    %7 = math.tanh %6 : vector<1x512xf32>
    %c0_6 = arith.constant 0 : index
    %c0_7 = arith.constant 0 : index
    %8 = vector.load %arg4[%c0_6, %c0_7] : memref<1x512xf32, #tpu.memory_space<vmem>>, vector<1x512xf32>
    tpu.vector_store %arg4[%c0_6, %c0_7], %7 {strides = array<i32>} : memref<1x512xf32, #tpu.memory_space<vmem>>, vector<1x512xf32>,
    return
  }
  func.func @transform_0(%arg0: i32) -> (i32, i32) {
    %c0_i32 = arith.constant 0 : i32
    %c0_i32_0 = arith.constant 0 : i32
    %c0_i32_1 = arith.constant 0 : i32
    return %c0_i32, %c0_i32_0 : i32, i32
  }
  func.func @transform_1(%arg0: i32) -> (i32, i32, i32) {
    %c0_i32 = arith.constant 0 : i32
    %c0_i32_0 = arith.constant 0 : i32
    %c0_i32_1 = arith.constant 0 : i32
    return %c0_i32, %c0_i32_0, %arg0 : i32, i32, i32
  }
  func.func @transform_2(%arg0: i32) -> (i32, i32) {
    %c0_i32 = arith.constant 0 : i32
    %c0_i32_0 = arith.constant 0 : i32
    %c0_i32_1 = arith.constant 0 : i32
    return %c0_i32, %c0_i32_0 : i32, i32
  }
  func.func @transform_3(%arg0: i32) -> (i32, i32) {
    %c0_i32 = arith.constant 0 : i32
    %c0_i32_0 = arith.constant 0 : i32
    return %c0_i32, %arg0 : i32, i32
  }
}

</mosaic_0001>

<llo_original>
// kernel: autoencoder_cnn_forward.5
$region0: #{autoencoder_cnn_forward.5}
  #allocation0 [shape = 'u32[]', space=smem, size = 0x4, offset = 0x4, fixed_abs, tag = 'smem constant byte address 0x4 - core index']
  #allocation1 [shape = 'u32[144,128]{1,0:T(1,128)}', space=vmem, size = 0x12000, scoped, tag = 'internal scratch']
  %s0 = inlined_call_operand.vmem [shape: f32[16,9], index: 0, kind: input, shape index: {}]
  %s1 = inlined_call_operand.vmem [shape: f32[4,9,128], index: 1, kind: input, shape index: {}]
  %s2 = inlined_call_operand.vmem [shape: f32[16,1], index: 2, kind: input, shape index: {}]
  %s3 = inlined_call_operand.vmem [shape: f32[16,128], index: 3, kind: output, shape index: {}]
  %s4 = sld [smem:[#allocation0]]
  $region22: #{autoencoder_cnn_forward.5} parent=0
    _
  %s6 = ssub.s32 1, %s4
  %s7 = scalar_select 0, %s6, %s4
  // Predicated region
  $region2: #{autoencoder_cnn_forward.5} parent=0 // pred_check
    _
  $region3: #{autoencoder_cnn_forward.5} parent=0 // pred_check_branch
    %9 = sbr.rel (0) target = $region5
  $region4: #{autoencoder_cnn_forward.5} parent=0 // pred_region
    _
  $region5: #{autoencoder_cnn_forward.5} parent=0 // pred_fallthru
    _
  // Predicated region
  $region6: #{autoencoder_cnn_forward.5} parent=0 // pred_check
    _
  $region7: #{autoencoder_cnn_forward.5} parent=0 // pred_check_branch
    %11 = sbr.rel (0) target = $region9
  $region8: #{autoencoder_cnn_forward.5} parent=0 // pred_region
    _
  $region9: #{autoencoder_cnn_forward.5} parent=0 // pred_fallthru
    _
  // Predicated region
  $region10: #{autoencoder_cnn_forward.5} parent=0 // pred_check
    _
  $region11: #{autoencoder_cnn_forward.5} parent=0 // pred_check_branch
    %13 = sbr.rel (0) target = $region13
  $region12: #{autoencoder_cnn_forward.5} parent=0 // pred_region
    _
  $region13: #{autoencoder_cnn_forward.5} parent=0 // pred_fallthru
    _
  %v14 = vld [vmem:[%s0] sm:$0xff]
  %v15 = vld [vmem:[%s0 + $0x8] sm:$0xff]
  %v16 = vld [vmem:[%s2] sm:$0xff]
  %v17 = vld [vmem:[%s2 + $0x8] sm:$0xff]
  %v18 = vld [vmem:[%s1] sm:$0xff]
  %v19 = vld [vmem:[%s1 + $0x8] sm:$0x1]
  %21 = vset.pattern.permute.xlu0 0
  %22 = vperm.xlu0 %21, %v16
  %v23 = vpop.permute.xlu0 %22
  %26 = vset.pattern.permute.xlu0 0
  %27 = vperm.xlu0 %26, %v17
  %v28 = vpop.permute.xlu0 %27
  %vm30 = vcmask 72704
  %v32 = vsel %vm30, %v14, 0
  %v35 = vsel %vm30, %v15, 0
  %vm37 = vcmask 1040384
  %v39 = vsel %vm37, %v19, 0
  %41 = vmatprep.subr.mxu0 0.0
  %42 = vmatpush1.msra.mxu0 0.0
  %43 = vmatprep.subr.mxu0 0.0
  %44 = vmatpush1.msra.mxu0 0.0
  %45 = vmatprep.subr.mxu0 0.0
  %46 = vmatpush1.msra.mxu0 0.0
  %47 = vmatprep.subr.mxu0 0.0
  %48 = vmatpush1.msra.mxu0 0.0
  %49 = vmatprep.subr.mxu0 0.0
  %50 = vmatpush1.msra.mxu0 0.0
  %51 = vmatprep.subr.mxu0 0.0
  %52 = vmatpush1.msra.mxu0 0.0
  %53 = vmatprep.subr.mxu0 0.0
  %54 = vmatpush1.msra.mxu0 0.0
  %55 = vmatprep.subr.mxu0 0.0
  %56 = vmatpush1.msra.mxu0 0.0
  %57 = vmatprep.subr.mxu0 0.0
  %58 = vmatpush1.msra.mxu0 0.0
  %59 = vmatprep.subr.mxu0 0.0
  %60 = vmatpush1.msra.mxu0 0.0
  %61 = vmatprep.subr.mxu0 0.0
  %62 = vmatpush1.msra.mxu0 0.0
  %63 = vmatprep.subr.mxu0 0.0
  %64 = vmatpush1.msra.mxu0 0.0
  %65 = vmatprep.subr.mxu0 0.0
  %66 = vmatpush1.msra.mxu0 0.0
  %67 = vmatprep.subr.mxu0 0.0
  %68 = vmatpush1.msra.mxu0 0.0
  %69 = vmatprep.subr.mxu0 0.0
  %70 = vmatpush1.msra.mxu0 %v39
  %71 = vmatprep.subr.mxu0 0.0
  %72 = vmatpush1.msra.mxu0 %v18
  %73 = vmatprep.subr.mxu0 0.0
  %74 = vmatpush2.msra.mxu0 0.0
  %75 = vmatprep.subr.mxu0 0.0
  %76 = vmatpush2.msra.mxu0 0.0
  %77 = vmatprep.subr.mxu0 0.0
  %78 = vmatpush2.msra.mxu0 0.0
  %79 = vmatprep.subr.mxu0 0.0
  %80 = vmatpush2.msra.mxu0 0.0
  %81 = vmatprep.subr.mxu0 0.0
  %82 = vmatpush2.msra.mxu0 0.0
  %83 = vmatprep.subr.mxu0 0.0
  %84 = vmatpush2.msra.mxu0 0.0
  %85 = vmatprep.subr.mxu0 0.0
  %86 = vmatpush2.msra.mxu0 0.0
  %87 = vmatprep.subr.mxu0 0.0
  %88 = vmatpush2.msra.mxu0 0.0
  %89 = vmatprep.subr.mxu0 0.0
  %90 = vmatpush2.msra.mxu0 0.0
  %91 = vmatprep.subr.mxu0 0.0
  %92 = vmatpush2.msra.mxu0 0.0
  %93 = vmatprep.subr.mxu0 0.0
  %94 = vmatpush2.msra.mxu0 0.0
  %95 = vmatprep.subr.mxu0 0.0
  %96 = vmatpush2.msra.mxu0 0.0
  %97 = vmatprep.subr.mxu0 0.0
  %98 = vmatpush2.msra.mxu0 0.0
  %99 = vmatprep.subr.mxu0 0.0
  %100 = vmatpush2.msra.mxu0 0.0
  %101 = vmatprep.subr.mxu0 0.0
  %102 = vmatpush2.msra.mxu0 0.0
  %103 = vmatprep.subr.mxu0 0.0
  %104 = vmatpush2.msra.mxu0 0.0
  %105 = vmatprep.mubr.f32.mxu0 0.0
  %106 = vmatmul.mubr.f32.gmra.mxu0 %v32
  %v107 = vpop.f32.mrf.mxu0
  %v108 = vadd.f32 %v23, %v107
  %v109 = vpop.f32.mrf.mxu0
  %110 = vmatprep.mubr.f32.mxu0 0.0
  %111 = vmatmul.mubr.f32.gmra.mxu0 %v35
  %v112 = vpop.f32.mrf.mxu0
  %v113 = vadd.f32 %v28, %v112
  %v114 = vpop.f32.mrf.mxu0
  %115 = vdwg.mxu0
  %s116 = scalar_lea.vmem %s1, 16
  %v117 = vld [vmem:[%s116] sm:$0xff]
  %v118 = vld [vmem:[%s116 + $0x8] sm:$0x1]
  %v120 = vsel %vm37, %v118, 0
  %122 = vmatprep.subr.mxu0 0.0
  %123 = vmatpush1.msra.mxu0 0.0
  %124 = vmatprep.subr.mxu0 0.0
  %125 = vmatpush1.msra.mxu0 0.0
  %126 = vmatprep.subr.mxu0 0.0
  %127 = vmatpush1.msra.mxu0 0.0
  %128 = vmatprep.subr.mxu0 0.0
  %129 = vmatpush1.msra.mxu0 0.0
  %130 = vmatprep.subr.mxu0 0.0
  %131 = vmatpush1.msra.mxu0 0.0
  %132 = vmatprep.subr.mxu0 0.0
  %133 = vmatpush1.msra.mxu0 0.0
  %134 = vmatprep.subr.mxu0 0.0
  %135 = vmatpush1.msra.mxu0 0.0
  %136 = vmatprep.subr.mxu0 0.0
  %137 = vmatpush1.msra.mxu0 0.0
  %138 = vmatprep.subr.mxu0 0.0
  %139 = vmatpush1.msra.mxu0 0.0
  %140 = vmatprep.subr.mxu0 0.0
  %141 = vmatpush1.msra.mxu0 0.0
  %142 = vmatprep.subr.mxu0 0.0
  %143 = vmatpush1.msra.mxu0 0.0
  %144 = vmatprep.subr.mxu0 0.0
  %145 = vmatpush1.msra.mxu0 0.0
  %146 = vmatprep.subr.mxu0 0.0
  %147 = vmatpush1.msra.mxu0 0.0
  %148 = vmatprep.subr.mxu0 0.0
  %149 = vmatpush1.msra.mxu0 0.0
  %150 = vmatprep.subr.mxu0 0.0
  %151 = vmatpush1.msra.mxu0 %v120
  %152 = vmatprep.subr.mxu0 0.0
  %153 = vmatpush1.msra.mxu0 %v117
  %154 = vmatprep.subr.mxu0 0.0
  %155 = vmatpush2.msra.mxu0 0.0
  %156 = vmatprep.subr.mxu0 0.0
  %157 = vmatpush2.msra.mxu0 0.0
  %158 = vmatprep.subr.mxu0 0.0
  %159 = vmatpush2.msra.mxu0 0.0
  %160 = vmatprep.subr.mxu0 0.0
  %161 = vmatpush2.msra.mxu0 0.0
  %162 = vmatprep.subr.mxu0 0.0
  %163 = vmatpush2.msra.mxu0 0.0
  %164 = vmatprep.subr.mxu0 0.0
  %165 = vmatpush2.msra.mxu0 0.0
  %166 = vmatprep.subr.mxu0 0.0
  %167 = vmatpush2.msra.mxu0 0.0
  %168 = vmatprep.subr.mxu0 0.0
  %169 = vmatpush2.msra.mxu0 0.0
  %170 = vmatprep.subr.mxu0 0.0
  %171 = vmatpush2.msra.mxu0 0.0
  %172 = vmatprep.subr.mxu0 0.0
  %173 = vmatpush2.msra.mxu0 0.0
  %174 = vmatprep.subr.mxu0 0.0
  %175 = vmatpush2.msra.mxu0 0.0
  %176 = vmatprep.subr.mxu0 0.0
  %177 = vmatpush2.msra.mxu0 0.0
  %178 = vmatprep.subr.mxu0 0.0
  %179 = vmatpush2.msra.mxu0 0.0
  %180 = vmatprep.subr.mxu0 0.0
  %181 = vmatpush2.msra.mxu0 0.0
  %182 = vmatprep.subr.mxu0 0.0
  %183 = vmatpush2.msra.mxu0 0.0
  %184 = vmatprep.subr.mxu0 0.0
  %185 = vmatpush2.msra.mxu0 0.0
  %186 = vmatprep.mubr.f32.mxu0 0.0
  %187 = vmatmul.mubr.f32.gmra.mxu0 %v32
  %v188 = vpop.f32.mrf.mxu0
  %v189 = vadd.f32 %v23, %v188
  %v190 = vpop.f32.mrf.mxu0
  %191 = vmatprep.mubr.f32.mxu0 0.0
  %192 = vmatmul.mubr.f32.gmra.mxu0 %v35
  %v193 = vpop.f32.mrf.mxu0
  %v194 = vadd.f32 %v28, %v193
  %v195 = vpop.f32.mrf.mxu0
  %196 = vdwg.mxu0
  %v197 = vmax.f32 %v108, %v189
  %v198 = vmax.f32 %v113, %v194
  %s199 = scalar_lea.vmem %s1, 32
  %v200 = vld [vmem:[%s199] sm:$0xff]
  %v201 = vld [vmem:[%s199 + $0x8] sm:$0x1]
  %v203 = vsel %vm37, %v201, 0
  %205 = vmatprep.subr.mxu0 0.0
  %206 = vmatpush1.msra.mxu0 0.0
  %207 = vmatprep.subr.mxu0 0.0
  %208 = vmatpush1.msra.mxu0 0.0
  %209 = vmatprep.subr.mxu0 0.0
  %210 = vmatpush1.msra.mxu0 0.0
  %211 = vmatprep.subr.mxu0 0.0
  %212 = vmatpush1.msra.mxu0 0.0
  %213 = vmatprep.subr.mxu0 0.0
  %214 = vmatpush1.msra.mxu0 0.0
  %215 = vmatprep.subr.mxu0 0.0
  %216 = vmatpush1.msra.mxu0 0.0
  %217 = vmatprep.subr.mxu0 0.0
  %218 = vmatpush1.msra.mxu0 0.0
  %219 = vmatprep.subr.mxu0 0.0
  %220 = vmatpush1.msra.mxu0 0.0
  %221 = vmatprep.subr.mxu0 0.0
  %222 = vmatpush1.msra.mxu0 0.0
  %223 = vmatprep.subr.mxu0 0.0
  %224 = vmatpush1.msra.mxu0 0.0
  %225 = vmatprep.subr.mxu0 0.0
  %226 = vmatpush1.msra.mxu0 0.0
  %227 = vmatprep.subr.mxu0 0.0
  %228 = vmatpush1.msra.mxu0 0.0
  %229 = vmatprep.subr.mxu0 0.0
  %230 = vmatpush1.msra.mxu0 0.0
  %231 = vmatprep.subr.mxu0 0.0
  %232 = vmatpush1.msra.mxu0 0.0
  %233 = vmatprep.subr.mxu0 0.0
  %234 = vmatpush1.msra.mxu0 %v203
  %235 = vmatprep.subr.mxu0 0.0
  %236 = vmatpush1.msra.mxu0 %v200
  %237 = vmatprep.subr.mxu0 0.0
  %238 = vmatpush2.msra.mxu0 0.0
  %239 = vmatprep.subr.mxu0 0.0
  %240 = vmatpush2.msra.mxu0 0.0
  %241 = vmatprep.subr.mxu0 0.0
  %242 = vmatpush2.msra.mxu0 0.0
  %243 = vmatprep.subr.mxu0 0.0
  %244 = vmatpush2.msra.mxu0 0.0
  %245 = vmatprep.subr.mxu0 0.0
  %246 = vmatpush2.msra.mxu0 0.0
  %247 = vmatprep.subr.mxu0 0.0
  %248 = vmatpush2.msra.mxu0 0.0
  %249 = vmatprep.subr.mxu0 0.0
  %250 = vmatpush2.msra.mxu0 0.0
  %251 = vmatprep.subr.mxu0 0.0
  %252 = vmatpush2.msra.mxu0 0.0
  %253 = vmatprep.subr.mxu0 0.0
  %254 = vmatpush2.msra.mxu0 0.0
  %255 = vmatprep.subr.mxu0 0.0
  %256 = vmatpush2.msra.mxu0 0.0
  %257 = vmatprep.subr.mxu0 0.0
  %258 = vmatpush2.msra.mxu0 0.0
  %259 = vmatprep.subr.mxu0 0.0
  %260 = vmatpush2.msra.mxu0 0.0
  %261 = vmatprep.subr.mxu0 0.0
  %262 = vmatpush2.msra.mxu0 0.0
  %263 = vmatprep.subr.mxu0 0.0
  %264 = vmatpush2.msra.mxu0 0.0
  %265 = vmatprep.subr.mxu0 0.0
  %266 = vmatpush2.msra.mxu0 0.0
  %267 = vmatprep.subr.mxu0 0.0
  %268 = vmatpush2.msra.mxu0 0.0
  %269 = vmatprep.mubr.f32.mxu0 0.0
  %270 = vmatmul.mubr.f32.gmra.mxu0 %v32
  %v271 = vpop.f32.mrf.mxu0
  %v272 = vadd.f32 %v23, %v271
  %v273 = vpop.f32.mrf.mxu0
  %274 = vmatprep.mubr.f32.mxu0 0.0
  %275 = vmatmul.mubr.f32.gmra.mxu0 %v35
  %v276 = vpop.f32.mrf.mxu0
  %v277 = vadd.f32 %v28, %v276
  %v278 = vpop.f32.mrf.mxu0
  %279 = vdwg.mxu0
  %v280 = vmax.f32 %v197, %v272
  %v281 = vmax.f32 %v198, %v277
  %s282 = scalar_lea.vmem %s1, 48
  %v283 = vld [vmem:[%s282] sm:$0xff]
  %v284 = vld [vmem:[%s282 + $0x8] sm:$0x1]
  %v286 = vsel %vm37, %v284, 0
  %288 = vmatprep.subr.mxu0 0.0
  %289 = vmatpush1.msra.mxu0 0.0
  %290 = vmatprep.subr.mxu0 0.0
  %291 = vmatpush1.msra.mxu0 0.0
  %292 = vmatprep.subr.mxu0 0.0
  %293 = vmatpush1.msra.mxu0 0.0
  %294 = vmatprep.subr.mxu0 0.0
  %295 = vmatpush1.msra.mxu0 0.0
  %296 = vmatprep.subr.mxu0 0.0
  %297 = vmatpush1.msra.mxu0 0.0
  %298 = vmatprep.subr.mxu0 0.0
  %299 = vmatpush1.msra.mxu0 0.0
  %300 = vmatprep.subr.mxu0 0.0
  %301 = vmatpush1.msra.mxu0 0.0
  %302 = vmatprep.subr.mxu0 0.0
  %303 = vmatpush1.msra.mxu0 0.0
  %304 = vmatprep.subr.mxu0 0.0
  %305 = vmatpush1.msra.mxu0 0.0
  %306 = vmatprep.subr.mxu0 0.0
  %307 = vmatpush1.msra.mxu0 0.0
  %308 = vmatprep.subr.mxu0 0.0
  %309 = vmatpush1.msra.mxu0 0.0
  %310 = vmatprep.subr.mxu0 0.0
  %311 = vmatpush1.msra.mxu0 0.0
  %312 = vmatprep.subr.mxu0 0.0
  %313 = vmatpush1.msra.mxu0 0.0
  %314 = vmatprep.subr.mxu0 0.0
  %315 = vmatpush1.msra.mxu0 0.0
  %316 = vmatprep.subr.mxu0 0.0
  %317 = vmatpush1.msra.mxu0 %v286
  %318 = vmatprep.subr.mxu0 0.0
  %319 = vmatpush1.msra.mxu0 %v283
  %320 = vmatprep.subr.mxu0 0.0
  %321 = vmatpush2.msra.mxu0 0.0
  %322 = vmatprep.subr.mxu0 0.0
  %323 = vmatpush2.msra.mxu0 0.0
  %324 = vmatprep.subr.mxu0 0.0
  %325 = vmatpush2.msra.mxu0 0.0
  %326 = vmatprep.subr.mxu0 0.0
  %327 = vmatpush2.msra.mxu0 0.0
  %328 = vmatprep.subr.mxu0 0.0
  %329 = vmatpush2.msra.mxu0 0.0
  %330 = vmatprep.subr.mxu0 0.0
  %331 = vmatpush2.msra.mxu0 0.0
  %332 = vmatprep.subr.mxu0 0.0
  %333 = vmatpush2.msra.mxu0 0.0
  %334 = vmatprep.subr.mxu0 0.0
  %335 = vmatpush2.msra.mxu0 0.0
  %336 = vmatprep.subr.mxu0 0.0
  %337 = vmatpush2.msra.mxu0 0.0
  %338 = vmatprep.subr.mxu0 0.0
  %339 = vmatpush2.msra.mxu0 0.0
  %340 = vmatprep.subr.mxu0 0.0
  %341 = vmatpush2.msra.mxu0 0.0
  %342 = vmatprep.subr.mxu0 0.0
  %343 = vmatpush2.msra.mxu0 0.0
  %344 = vmatprep.subr.mxu0 0.0
  %345 = vmatpush2.msra.mxu0 0.0
  %346 = vmatprep.subr.mxu0 0.0
  %347 = vmatpush2.msra.mxu0 0.0
  %348 = vmatprep.subr.mxu0 0.0
  %349 = vmatpush2.msra.mxu0 0.0
  %350 = vmatprep.subr.mxu0 0.0
  %351 = vmatpush2.msra.mxu0 0.0
  %352 = vmatprep.mubr.f32.mxu0 0.0
  %353 = vmatmul.mubr.f32.gmra.mxu0 %v32
  %v354 = vpop.f32.mrf.mxu0
  %v355 = vadd.f32 %v23, %v354
  %v356 = vpop.f32.mrf.mxu0
  %357 = vmatprep.mubr.f32.mxu0 0.0
  %358 = vmatmul.mubr.f32.gmra.mxu0 %v35
  %v359 = vpop.f32.mrf.mxu0
  %v360 = vadd.f32 %v28, %v359
  %v361 = vpop.f32.mrf.mxu0
  %362 = vdwg.mxu0
  %v363 = vmax.f32 %v280, %v355
  %v364 = vmax.f32 %v281, %v360
  %v365 = vmax.f32 %v363, 0.0
  %v366 = vmax.f32 %v364, 0.0
  %367 = vst [vmem:[%s3] sm:$0xff] %v365
  %368 = vst [vmem:[%s3 + $0x8] sm:$0xff] %v366
  // Predicated region
  $region14: #{autoencoder_cnn_forward.5} parent=0 // pred_check
    _
  $region15: #{autoencoder_cnn_forward.5} parent=0 // pred_check_branch
    %370 = sbr.rel (0) target = $region17
  $region16: #{autoencoder_cnn_forward.5} parent=0 // pred_region
    _
  $region17: #{autoencoder_cnn_forward.5} parent=0 // pred_fallthru
    _
  // Predicated region
  $region18: #{autoencoder_cnn_forward.5} parent=0 // pred_check
    _
  $region19: #{autoencoder_cnn_forward.5} parent=0 // pred_check_branch
    %372 = sbr.rel (0) target = $region21
  $region20: #{autoencoder_cnn_forward.5} parent=0 // pred_region
    _
  $region21: #{autoencoder_cnn_forward.5} parent=0 // pred_fallthru
    _

// kernel: autoencoder_cnn_forward.6
$region0: #{autoencoder_cnn_forward.6}
  #allocation0 [shape = 'u32[]', space=smem, size = 0x4, offset = 0x4, fixed_abs, tag = 'smem constant byte address 0x4 - core index']
  #allocation1 [shape = 'u32[144,128]{1,0:T(1,128)}', space=vmem, size = 0x12000, scoped, tag = 'internal scratch']
  %s0 = inlined_call_operand.vmem [shape: f32[8,144], index: 0, kind: input, shape index: {}]
  %s1 = inlined_call_operand.vmem [shape: f32[4,144,32], index: 1, kind: input, shape index: {}]
  %s2 = inlined_call_operand.vmem [shape: f32[8,1], index: 2, kind: input, shape index: {}]
  %s3 = inlined_call_operand.vmem [shape: f32[8,32], index: 3, kind: output, shape index: {}]
  %s4 = sld [smem:[#allocation0]]
  $region22: #{autoencoder_cnn_forward.6} parent=0
    _
  %s6 = ssub.s32 1, %s4
  %s7 = scalar_select 0, %s6, %s4
  // Predicated region
  $region2: #{autoencoder_cnn_forward.6} parent=0 // pred_check
    _
  $region3: #{autoencoder_cnn_forward.6} parent=0 // pred_check_branch
    %9 = sbr.rel (0) target = $region5
  $region4: #{autoencoder_cnn_forward.6} parent=0 // pred_region
    _
  $region5: #{autoencoder_cnn_forward.6} parent=0 // pred_fallthru
    _
  // Predicated region
  $region6: #{autoencoder_cnn_forward.6} parent=0 // pred_check
    _
  $region7: #{autoencoder_cnn_forward.6} parent=0 // pred_check_branch
    %11 = sbr.rel (0) target = $region9
  $region8: #{autoencoder_cnn_forward.6} parent=0 // pred_region
    _
  $region9: #{autoencoder_cnn_forward.6} parent=0 // pred_fallthru
    _
  // Predicated region
  $region10: #{autoencoder_cnn_forward.6} parent=0 // pred_check
    _
  $region11: #{autoencoder_cnn_forward.6} parent=0 // pred_check_branch
    %13 = sbr.rel (0) target = $region13
  $region12: #{autoencoder_cnn_forward.6} parent=0 // pred_region
    _
  $region13: #{autoencoder_cnn_forward.6} parent=0 // pred_fallthru
    _
  %v14 = vld [vmem:[%s0] sm:$0xff]
  %v15 = vld [vmem:[%s0 + $0x8] sm:$0xff]
  %v16 = vld [vmem:[%s2] sm:$0xff]
  %v17 = vld [vmem:[%s1] sm:$0xff]
  %v18 = vld [vmem:[%s1 + $0x8] sm:$0xff]
  %v19 = vld [vmem:[%s1 + $0x10] sm:$0xff]
  %v20 = vld [vmem:[%s1 + $0x18] sm:$0xff]
  %v21 = vld [vmem:[%s1 + $0x20] sm:$0xff]
  %v22 = vld [vmem:[%s1 + $0x28] sm:$0xff]
  %v23 = vld [vmem:[%s1 + $0x30] sm:$0xff]
  %v24 = vld [vmem:[%s1 + $0x38] sm:$0xff]
  %v25 = vld [vmem:[%s1 + $0x40] sm:$0xff]
  %v26 = vld [vmem:[%s1 + $0x48] sm:$0xff]
  %v27 = vld [vmem:[%s1 + $0x50] sm:$0xff]
  %v28 = vld [vmem:[%s1 + $0x58] sm:$0xff]
  %v29 = vld [vmem:[%s1 + $0x60] sm:$0xff]
  %v30 = vld [vmem:[%s1 + $0x68] sm:$0xff]
  %v31 = vld [vmem:[%s1 + $0x70] sm:$0xff]
  %v32 = vld [vmem:[%s1 + $0x78] sm:$0xff]
  %v33 = vld [vmem:[%s1 + $0x80] sm:$0xff]
  %v34 = vld [vmem:[%s1 + $0x88] sm:$0xff]
  %36 = vset.pattern.permute.xlu0 0
  %37 = vperm.xlu0 %36, %v16
  %v38 = vpop.permute.xlu0 %37
  %vm40 = vcmask 130048
  %v42 = vsel %vm40, %v15, 0
  %44 = vmatprep.subr.mxu0 0.0
  %45 = vmatpush1.msra.mxu0 %v32
  %46 = vmatprep.subr.mxu0 0.0
  %47 = vmatpush1.msra.mxu0 %v31
  %48 = vmatprep.subr.mxu0 0.0
  %49 = vmatpush1.msra.mxu0 %v30
  %50 = vmatprep.subr.mxu0 0.0
  %51 = vmatpush1.msra.mxu0 %v29
  %52 = vmatprep.subr.mxu0 0.0
  %53 = vmatpush1.msra.mxu0 %v28
  %54 = vmatprep.subr.mxu0 0.0
  %55 = vmatpush1.msra.mxu0 %v27
  %56 = vmatprep.subr.mxu0 0.0
  %57 = vmatpush1.msra.mxu0 %v26
  %58 = vmatprep.subr.mxu0 0.0
  %59 = vmatpush1.msra.mxu0 %v25
  %60 = vmatprep.subr.mxu0 0.0
  %61 = vmatpush1.msra.mxu0 %v24
  %62 = vmatprep.subr.mxu0 0.0
  %63 = vmatpush1.msra.mxu0 %v23
  %64 = vmatprep.subr.mxu0 0.0
  %65 = vmatpush1.msra.mxu0 %v22
  %66 = vmatprep.subr.mxu0 0.0
  %67 = vmatpush1.msra.mxu0 %v21
  %68 = vmatprep.subr.mxu0 0.0
  %69 = vmatpush1.msra.mxu0 %v20
  %70 = vmatprep.subr.mxu0 0.0
  %71 = vmatpush1.msra.mxu0 %v19
  %72 = vmatprep.subr.mxu0 0.0
  %73 = vmatpush1.msra.mxu0 %v18
  %74 = vmatprep.subr.mxu0 0.0
  %75 = vmatpush1.msra.mxu0 %v17
  %76 = vmatprep.subr.mxu0 0.0
  %77 = vmatpush2.msra.mxu0 0.0
  %78 = vmatprep.subr.mxu0 0.0
  %79 = vmatpush2.msra.mxu0 0.0
  %80 = vmatprep.subr.mxu0 0.0
  %81 = vmatpush2.msra.mxu0 0.0
  %82 = vmatprep.subr.mxu0 0.0
  %83 = vmatpush2.msra.mxu0 0.0
  %84 = vmatprep.subr.mxu0 0.0
  %85 = vmatpush2.msra.mxu0 0.0
  %86 = vmatprep.subr.mxu0 0.0
  %87 = vmatpush2.msra.mxu0 0.0
  %88 = vmatprep.subr.mxu0 0.0
  %89 = vmatpush2.msra.mxu0 0.0
  %90 = vmatprep.subr.mxu0 0.0
  %91 = vmatpush2.msra.mxu0 0.0
  %92 = vmatprep.subr.mxu0 0.0
  %93 = vmatpush2.msra.mxu0 0.0
  %94 = vmatprep.subr.mxu0 0.0
  %95 = vmatpush2.msra.mxu0 0.0
  %96 = vmatprep.subr.mxu0 0.0
  %97 = vmatpush2.msra.mxu0 0.0
  %98 = vmatprep.subr.mxu0 0.0
  %99 = vmatpush2.msra.mxu0 0.0
  %100 = vmatprep.subr.mxu0 0.0
  %101 = vmatpush2.msra.mxu0 0.0
  %102 = vmatprep.subr.mxu0 0.0
  %103 = vmatpush2.msra.mxu0 0.0
  %104 = vmatprep.subr.mxu0 0.0
  %105 = vmatpush2.msra.mxu0 %v34
  %106 = vmatprep.subr.mxu0 0.0
  %107 = vmatpush2.msra.mxu0 %v33
  %108 = vmatprep.mubr.f32.mxu0 %v42
  %109 = vmatmul.mubr.f32.gmra.mxu0 %v14
  %v110 = vpop.f32.mrf.mxu0
  %v111 = vadd.f32 %v38, %v110
  %v112 = vpop.f32.mrf.mxu0
  %113 = vdwg.mxu0
  %s114 = scalar_lea.vmem %s1, 144
  %v115 = vld [vmem:[%s114] sm:$0xff]
  %v116 = vld [vmem:[%s114 + $0x8] sm:$0xff]
  %v117 = vld [vmem:[%s114 + $0x10] sm:$0xff]
  %v118 = vld [vmem:[%s114 + $0x18] sm:$0xff]
  %v119 = vld [vmem:[%s114 + $0x20] sm:$0xff]
  %v120 = vld [vmem:[%s114 + $0x28] sm:$0xff]
  %v121 = vld [vmem:[%s114 + $0x30] sm:$0xff]
  %v122 = vld [vmem:[%s114 + $0x38] sm:$0xff]
  %v123 = vld [vmem:[%s114 + $0x40] sm:$0xff]
  %v124 = vld [vmem:[%s114 + $0x48] sm:$0xff]
  %v125 = vld [vmem:[%s114 + $0x50] sm:$0xff]
  %v126 = vld [vmem:[%s114 + $0x58] sm:$0xff]
  %v127 = vld [vmem:[%s114 + $0x60] sm:$0xff]
  %v128 = vld [vmem:[%s114 + $0x68] sm:$0xff]
  %v129 = vld [vmem:[%s114 + $0x70] sm:$0xff]
  %v130 = vld [vmem:[%s114 + $0x78] sm:$0xff]
  %v131 = vld [vmem:[%s114 + $0x80] sm:$0xff]
  %v132 = vld [vmem:[%s114 + $0x88] sm:$0xff]
  %133 = vmatprep.subr.mxu0 0.0
  %134 = vmatpush1.msra.mxu0 %v130
  %135 = vmatprep.subr.mxu0 0.0
  %136 = vmatpush1.msra.mxu0 %v129
  %137 = vmatprep.subr.mxu0 0.0
  %138 = vmatpush1.msra.mxu0 %v128
  %139 = vmatprep.subr.mxu0 0.0
  %140 = vmatpush1.msra.mxu0 %v127
  %141 = vmatprep.subr.mxu0 0.0
  %142 = vmatpush1.msra.mxu0 %v126
  %143 = vmatprep.subr.mxu0 0.0
  %144 = vmatpush1.msra.mxu0 %v125
  %145 = vmatprep.subr.mxu0 0.0
  %146 = vmatpush1.msra.mxu0 %v124
  %147 = vmatprep.subr.mxu0 0.0
  %148 = vmatpush1.msra.mxu0 %v123
  %149 = vmatprep.subr.mxu0 0.0
  %150 = vmatpush1.msra.mxu0 %v122
  %151 = vmatprep.subr.mxu0 0.0
  %152 = vmatpush1.msra.mxu0 %v121
  %153 = vmatprep.subr.mxu0 0.0
  %154 = vmatpush1.msra.mxu0 %v120
  %155 = vmatprep.subr.mxu0 0.0
  %156 = vmatpush1.msra.mxu0 %v119
  %157 = vmatprep.subr.mxu0 0.0
  %158 = vmatpush1.msra.mxu0 %v118
  %159 = vmatprep.subr.mxu0 0.0
  %160 = vmatpush1.msra.mxu0 %v117
  %161 = vmatprep.subr.mxu0 0.0
  %162 = vmatpush1.msra.mxu0 %v116
  %163 = vmatprep.subr.mxu0 0.0
  %164 = vmatpush1.msra.mxu0 %v115
  %165 = vmatprep.subr.mxu0 0.0
  %166 = vmatpush2.msra.mxu0 0.0
  %167 = vmatprep.subr.mxu0 0.0
  %168 = vmatpush2.msra.mxu0 0.0
  %169 = vmatprep.subr.mxu0 0.0
  %170 = vmatpush2.msra.mxu0 0.0
  %171 = vmatprep.subr.mxu0 0.0
  %172 = vmatpush2.msra.mxu0 0.0
  %173 = vmatprep.subr.mxu0 0.0
  %174 = vmatpush2.msra.mxu0 0.0
  %175 = vmatprep.subr.mxu0 0.0
  %176 = vmatpush2.msra.mxu0 0.0
  %177 = vmatprep.subr.mxu0 0.0
  %178 = vmatpush2.msra.mxu0 0.0
  %179 = vmatprep.subr.mxu0 0.0
  %180 = vmatpush2.msra.mxu0 0.0
  %181 = vmatprep.subr.mxu0 0.0
  %182 = vmatpush2.msra.mxu0 0.0
  %183 = vmatprep.subr.mxu0 0.0
  %184 = vmatpush2.msra.mxu0 0.0
  %185 = vmatprep.subr.mxu0 0.0
  %186 = vmatpush2.msra.mxu0 0.0
  %187 = vmatprep.subr.mxu0 0.0
  %188 = vmatpush2.msra.mxu0 0.0
  %189 = vmatprep.subr.mxu0 0.0
  %190 = vmatpush2.msra.mxu0 0.0
  %191 = vmatprep.subr.mxu0 0.0
  %192 = vmatpush2.msra.mxu0 0.0
  %193 = vmatprep.subr.mxu0 0.0
  %194 = vmatpush2.msra.mxu0 %v132
  %195 = vmatprep.subr.mxu0 0.0
  %196 = vmatpush2.msra.mxu0 %v131
  %197 = vmatprep.mubr.f32.mxu0 %v42
  %198 = vmatmul.mubr.f32.gmra.mxu0 %v14
  %v199 = vpop.f32.mrf.mxu0
  %v200 = vadd.f32 %v38, %v199
  %v201 = vpop.f32.mrf.mxu0
  %202 = vdwg.mxu0
  %v203 = vmax.f32 %v111, %v200
  %s204 = scalar_lea.vmem %s1, 288
  %v205 = vld [vmem:[%s204] sm:$0xff]
  %v206 = vld [vmem:[%s204 + $0x8] sm:$0xff]
  %v207 = vld [vmem:[%s204 + $0x10] sm:$0xff]
  %v208 = vld [vmem:[%s204 + $0x18] sm:$0xff]
  %v209 = vld [vmem:[%s204 + $0x20] sm:$0xff]
  %v210 = vld [vmem:[%s204 + $0x28] sm:$0xff]
  %v211 = vld [vmem:[%s204 + $0x30] sm:$0xff]
  %v212 = vld [vmem:[%s204 + $0x38] sm:$0xff]
  %v213 = vld [vmem:[%s204 + $0x40] sm:$0xff]
  %v214 = vld [vmem:[%s204 + $0x48] sm:$0xff]
  %v215 = vld [vmem:[%s204 + $0x50] sm:$0xff]
  %v216 = vld [vmem:[%s204 + $0x58] sm:$0xff]
  %v217 = vld [vmem:[%s204 + $0x60] sm:$0xff]
  %v218 = vld [vmem:[%s204 + $0x68] sm:$0xff]
  %v219 = vld [vmem:[%s204 + $0x70] sm:$0xff]
  %v220 = vld [vmem:[%s204 + $0x78] sm:$0xff]
  %v221 = vld [vmem:[%s204 + $0x80] sm:$0xff]
  %v222 = vld [vmem:[%s204 + $0x88] sm:$0xff]
  %223 = vmatprep.subr.mxu0 0.0
  %224 = vmatpush1.msra.mxu0 %v220
  %225 = vmatprep.subr.mxu0 0.0
  %226 = vmatpush1.msra.mxu0 %v219
  %227 = vmatprep.subr.mxu0 0.0
  %228 = vmatpush1.msra.mxu0 %v218
  %229 = vmatprep.subr.mxu0 0.0
  %230 = vmatpush1.msra.mxu0 %v217
  %231 = vmatprep.subr.mxu0 0.0
  %232 = vmatpush1.msra.mxu0 %v216
  %233 = vmatprep.subr.mxu0 0.0
  %234 = vmatpush1.msra.mxu0 %v215
  %235 = vmatprep.subr.mxu0 0.0
  %236 = vmatpush1.msra.mxu0 %v214
  %237 = vmatprep.subr.mxu0 0.0
  %238 = vmatpush1.msra.mxu0 %v213
  %239 = vmatprep.subr.mxu0 0.0
  %240 = vmatpush1.msra.mxu0 %v212
  %241 = vmatprep.subr.mxu0 0.0
  %242 = vmatpush1.msra.mxu0 %v211
  %243 = vmatprep.subr.mxu0 0.0
  %244 = vmatpush1.msra.mxu0 %v210
  %245 = vmatprep.subr.mxu0 0.0
  %246 = vmatpush1.msra.mxu0 %v209
  %247 = vmatprep.subr.mxu0 0.0
  %248 = vmatpush1.msra.mxu0 %v208
  %249 = vmatprep.subr.mxu0 0.0
  %250 = vmatpush1.msra.mxu0 %v207
  %251 = vmatprep.subr.mxu0 0.0
  %252 = vmatpush1.msra.mxu0 %v206
  %253 = vmatprep.subr.mxu0 0.0
  %254 = vmatpush1.msra.mxu0 %v205
  %255 = vmatprep.subr.mxu0 0.0
  %256 = vmatpush2.msra.mxu0 0.0
  %257 = vmatprep.subr.mxu0 0.0
  %258 = vmatpush2.msra.mxu0 0.0
  %259 = vmatprep.subr.mxu0 0.0
  %260 = vmatpush2.msra.mxu0 0.0
  %261 = vmatprep.subr.mxu0 0.0
  %262 = vmatpush2.msra.mxu0 0.0
  %263 = vmatprep.subr.mxu0 0.0
  %264 = vmatpush2.msra.mxu0 0.0
  %265 = vmatprep.subr.mxu0 0.0
  %266 = vmatpush2.msra.mxu0 0.0
  %267 = vmatprep.subr.mxu0 0.0
  %268 = vmatpush2.msra.mxu0 0.0
  %269 = vmatprep.subr.mxu0 0.0
  %270 = vmatpush2.msra.mxu0 0.0
  %271 = vmatprep.subr.mxu0 0.0
  %272 = vmatpush2.msra.mxu0 0.0
  %273 = vmatprep.subr.mxu0 0.0
  %274 = vmatpush2.msra.mxu0 0.0
  %275 = vmatprep.subr.mxu0 0.0
  %276 = vmatpush2.msra.mxu0 0.0
  %277 = vmatprep.subr.mxu0 0.0
  %278 = vmatpush2.msra.mxu0 0.0
  %279 = vmatprep.subr.mxu0 0.0
  %280 = vmatpush2.msra.mxu0 0.0
  %281 = vmatprep.subr.mxu0 0.0
  %282 = vmatpush2.msra.mxu0 0.0
  %283 = vmatprep.subr.mxu0 0.0
  %284 = vmatpush2.msra.mxu0 %v222
  %285 = vmatprep.subr.mxu0 0.0
  %286 = vmatpush2.msra.mxu0 %v221
  %287 = vmatprep.mubr.f32.mxu0 %v42
  %288 = vmatmul.mubr.f32.gmra.mxu0 %v14
  %v289 = vpop.f32.mrf.mxu0
  %v290 = vadd.f32 %v38, %v289
  %v291 = vpop.f32.mrf.mxu0
  %292 = vdwg.mxu0
  %v293 = vmax.f32 %v203, %v290
  %s294 = scalar_lea.vmem %s1, 432
  %v295 = vld [vmem:[%s294] sm:$0xff]
  %v296 = vld [vmem:[%s294 + $0x8] sm:$0xff]
  %v297 = vld [vmem:[%s294 + $0x10] sm:$0xff]
  %v298 = vld [vmem:[%s294 + $0x18] sm:$0xff]
  %v299 = vld [vmem:[%s294 + $0x20] sm:$0xff]
  %v300 = vld [vmem:[%s294 + $0x28] sm:$0xff]
  %v301 = vld [vmem:[%s294 + $0x30] sm:$0xff]
  %v302 = vld [vmem:[%s294 + $0x38] sm:$0xff]
  %v303 = vld [vmem:[%s294 + $0x40] sm:$0xff]
  %v304 = vld [vmem:[%s294 + $0x48] sm:$0xff]
  %v305 = vld [vmem:[%s294 + $0x50] sm:$0xff]
  %v306 = vld [vmem:[%s294 + $0x58] sm:$0xff]
  %v307 = vld [vmem:[%s294 + $0x60] sm:$0xff]
  %v308 = vld [vmem:[%s294 + $0x68] sm:$0xff]
  %v309 = vld [vmem:[%s294 + $0x70] sm:$0xff]
  %v310 = vld [vmem:[%s294 + $0x78] sm:$0xff]
  %v311 = vld [vmem:[%s294 + $0x80] sm:$0xff]
  %v312 = vld [vmem:[%s294 + $0x88] sm:$0xff]
  %313 = vmatprep.subr.mxu0 0.0
  %314 = vmatpush1.msra.mxu0 %v310
  %315 = vmatprep.subr.mxu0 0.0
  %316 = vmatpush1.msra.mxu0 %v309
  %317 = vmatprep.subr.mxu0 0.0
  %318 = vmatpush1.msra.mxu0 %v308
  %319 = vmatprep.subr.mxu0 0.0
  %320 = vmatpush1.msra.mxu0 %v307
  %321 = vmatprep.subr.mxu0 0.0
  %322 = vmatpush1.msra.mxu0 %v306
  %323 = vmatprep.subr.mxu0 0.0
  %324 = vmatpush1.msra.mxu0 %v305
  %325 = vmatprep.subr.mxu0 0.0
  %326 = vmatpush1.msra.mxu0 %v304
  %327 = vmatprep.subr.mxu0 0.0
  %328 = vmatpush1.msra.mxu0 %v303
  %329 = vmatprep.subr.mxu0 0.0
  %330 = vmatpush1.msra.mxu0 %v302
  %331 = vmatprep.subr.mxu0 0.0
  %332 = vmatpush1.msra.mxu0 %v301
  %333 = vmatprep.subr.mxu0 0.0
  %334 = vmatpush1.msra.mxu0 %v300
  %335 = vmatprep.subr.mxu0 0.0
  %336 = vmatpush1.msra.mxu0 %v299
  %337 = vmatprep.subr.mxu0 0.0
  %338 = vmatpush1.msra.mxu0 %v298
  %339 = vmatprep.subr.mxu0 0.0
  %340 = vmatpush1.msra.mxu0 %v297
  %341 = vmatprep.subr.mxu0 0.0
  %342 = vmatpush1.msra.mxu0 %v296
  %343 = vmatprep.subr.mxu0 0.0
  %344 = vmatpush1.msra.mxu0 %v295
  %345 = vmatprep.subr.mxu0 0.0
  %346 = vmatpush2.msra.mxu0 0.0
  %347 = vmatprep.subr.mxu0 0.0
  %348 = vmatpush2.msra.mxu0 0.0
  %349 = vmatprep.subr.mxu0 0.0
  %350 = vmatpush2.msra.mxu0 0.0
  %351 = vmatprep.subr.mxu0 0.0
  %352 = vmatpush2.msra.mxu0 0.0
  %353 = vmatprep.subr.mxu0 0.0
  %354 = vmatpush2.msra.mxu0 0.0
  %355 = vmatprep.subr.mxu0 0.0
  %356 = vmatpush2.msra.mxu0 0.0
  %357 = vmatprep.subr.mxu0 0.0
  %358 = vmatpush2.msra.mxu0 0.0
  %359 = vmatprep.subr.mxu0 0.0
  %360 = vmatpush2.msra.mxu0 0.0
  %361 = vmatprep.subr.mxu0 0.0
  %362 = vmatpush2.msra.mxu0 0.0
  %363 = vmatprep.subr.mxu0 0.0
  %364 = vmatpush2.msra.mxu0 0.0
  %365 = vmatprep.subr.mxu0 0.0
  %366 = vmatpush2.msra.mxu0 0.0
  %367 = vmatprep.subr.mxu0 0.0
  %368 = vmatpush2.msra.mxu0 0.0
  %369 = vmatprep.subr.mxu0 0.0
  %370 = vmatpush2.msra.mxu0 0.0
  %371 = vmatprep.subr.mxu0 0.0
  %372 = vmatpush2.msra.mxu0 0.0
  %373 = vmatprep.subr.mxu0 0.0
  %374 = vmatpush2.msra.mxu0 %v312
  %375 = vmatprep.subr.mxu0 0.0
  %376 = vmatpush2.msra.mxu0 %v311
  %377 = vmatprep.mubr.f32.mxu0 %v42
  %378 = vmatmul.mubr.f32.gmra.mxu0 %v14
  %v379 = vpop.f32.mrf.mxu0
  %v380 = vadd.f32 %v38, %v379
  %v381 = vpop.f32.mrf.mxu0
  %382 = vdwg.mxu0
  %v383 = vmax.f32 %v293, %v380
  %v384 = vmax.f32 %v383, 0.0
  %vm385 = vcmask 261120
  %386 = vst.msk [vmem:[%s3] sm:$0xff] %vm385, %v384
  // Predicated region
  $region14: #{autoencoder_cnn_forward.6} parent=0 // pred_check
    _
  $region15: #{autoencoder_cnn_forward.6} parent=0 // pred_check_branch
    %388 = sbr.rel (0) target = $region17
  $region16: #{autoencoder_cnn_forward.6} parent=0 // pred_region
    _
  $region17: #{autoencoder_cnn_forward.6} parent=0 // pred_fallthru
    _
  // Predicated region
  $region18: #{autoencoder_cnn_forward.6} parent=0 // pred_check
    _
  $region19: #{autoencoder_cnn_forward.6} parent=0 // pred_check_branch
    %390 = sbr.rel (0) target = $region21
  $region20: #{autoencoder_cnn_forward.6} parent=0 // pred_region
    _
  $region21: #{autoencoder_cnn_forward.6} parent=0 // pred_fallthru
    _

// kernel: tile.13
$region0: #{tile.13}
  #allocation0 [shape = 's32[1]{0}', space=sflag, size = 0x4, scoped, tag = 'scoped memory for tile.13']
  %s0 = inlined_call_operand.vmem [shape: f32[16], index: 0, kind: input, shape index: {}]
  %s1 = inlined_call_operand.vmem [shape: f32[4,16], index: 1, kind: output, shape index: {}]
  // Predicated region
  $region2: #{tile.13} parent=0 // pred_check
    _
  $region3: #{tile.13} parent=0 // pred_check_branch
    %3 = sbr.rel (0) target = $region5
  $region4: #{tile.13} parent=0 // pred_region
    _
  $region5: #{tile.13} parent=0 // pred_fallthru
    _
  %v4 = vld [vmem:[%s0] ss:$0 sm:$0xff]
  %5 = vst [vmem:[%s1] sm:$0xf] %v4

// kernel: tile.0
$region0: #{tile.0}
  %s0 = inlined_call_operand.vmem [shape: f32[4,16], index: 0, kind: input, shape index: {}]
  %s1 = inlined_call_operand.vmem [shape: f32[64,1], index: 1, kind: output, shape index: {}]
  $region1: #{tile.0} parent=0
    #allocation0 [shape = 'u8[4096]{0}', space=vmem, size = 0x1000, scoped, tag = 'scoped mem for input reshape']
    %s3 = sshll.u32 1, 4
    %s4 = ssub.s32 %s3, 1
    %v5 = vld [vmem:[%s0] sm:%s4]
    %6 = vst [vmem:[#allocation0] sm:%s4] %v5
    %v7 = vld [vmem:[#allocation0] sm:$0xf]
    %vm8 = vcmask 7168
    %9 = vst.msk [vmem:[%s1] ss:$16 sm:$0x3] %vm8, %v7
    %10 = vst.msk [vmem:[%s1] ss:$16 sm:$0xc] %vm8, %v7
    %v11 = vld [vmem:[#allocation0] sm:$0xf]
    %12 = vrot.lane.b32.xlu0 %v11, 127
    %v13 = vpop.permute.xlu0 %12
    %vm14 = vcmask 7168
    %s15 = scalar_lea.vmem %s1, 1
    %16 = vst.msk [vmem:[%s15] ss:$16 sm:$0x3] %vm14, %v13
    %s17 = scalar_lea.vmem %s1, 1
    %18 = vst.msk [vmem:[%s17] ss:$16 sm:$0xc] %vm14, %v13
    %v19 = vld [vmem:[#allocation0] sm:$0xf]
    %20 = vrot.lane.b32.xlu0 %v19, 126
    %v21 = vpop.permute.xlu0 %20
    %vm22 = vcmask 7168
    %s23 = scalar_lea.vmem %s1, 2
    %24 = vst.msk [vmem:[%s23] ss:$16 sm:$0x3] %vm22, %v21
    %s25 = scalar_lea.vmem %s1, 2
    %26 = vst.msk [vmem:[%s25] ss:$16 sm:$0xc] %vm22, %v21
    %v27 = vld [vmem:[#allocation0] sm:$0xf]
    %28 = vrot.lane.b32.xlu0 %v27, 125
    %v29 = vpop.permute.xlu0 %28
    %vm30 = vcmask 7168
    %s31 = scalar_lea.vmem %s1, 3
    %32 = vst.msk [vmem:[%s31] ss:$16 sm:$0x3] %vm30, %v29
    %s33 = scalar_lea.vmem %s1, 3
    %34 = vst.msk [vmem:[%s33] ss:$16 sm:$0xc] %vm30, %v29
    %v35 = vld [vmem:[#allocation0] sm:$0xf]
    %36 = vrot.lane.b32.xlu0 %v35, 124
    %v37 = vpop.permute.xlu0 %36
    %vm38 = vcmask 7168
    %s39 = scalar_lea.vmem %s1, 4
    %40 = vst.msk [vmem:[%s39] ss:$16 sm:$0x3] %vm38, %v37
    %s41 = scalar_lea.vmem %s1, 4
    %42 = vst.msk [vmem:[%s41] ss:$16 sm:$0xc] %vm38, %v37
    %v43 = vld [vmem:[#allocation0] sm:$0xf]
    %44 = vrot.lane.b32.xlu0 %v43, 123
    %v45 = vpop.permute.xlu0 %44
    %vm46 = vcmask 7168
    %s47 = scalar_lea.vmem %s1, 5
    %48 = vst.msk [vmem:[%s47] ss:$16 sm:$0x3] %vm46, %v45
    %s49 = scalar_lea.vmem %s1, 5
    %50 = vst.msk [vmem:[%s49] ss:$16 sm:$0xc] %vm46, %v45
    %v51 = vld [vmem:[#allocation0] sm:$0xf]
    %52 = vrot.lane.b32.xlu0 %v51, 122
    %v53 = vpop.permute.xlu0 %52
    %vm54 = vcmask 7168
    %s55 = scalar_lea.vmem %s1, 6
    %56 = vst.msk [vmem:[%s55] ss:$16 sm:$0x3] %vm54, %v53
    %s57 = scalar_lea.vmem %s1, 6
    %58 = vst.msk [vmem:[%s57] ss:$16 sm:$0xc] %vm54, %v53
    %v59 = vld [vmem:[#allocation0] sm:$0xf]
    %60 = vrot.lane.b32.xlu0 %v59, 121
    %v61 = vpop.permute.xlu0 %60
    %vm62 = vcmask 7168
    %s63 = scalar_lea.vmem %s1, 7
    %64 = vst.msk [vmem:[%s63] ss:$16 sm:$0x3] %vm62, %v61
    %s65 = scalar_lea.vmem %s1, 7
    %66 = vst.msk [vmem:[%s65] ss:$16 sm:$0xc] %vm62, %v61
    %v67 = vld [vmem:[#allocation0] sm:$0xf]
    %68 = vrot.lane.b32.xlu0 %v67, 120
    %v69 = vpop.permute.xlu0 %68
    %vm70 = vcmask 7168
    %s71 = scalar_lea.vmem %s1, 8
    %72 = vst.msk [vmem:[%s71] ss:$16 sm:$0x3] %vm70, %v69
    %s73 = scalar_lea.vmem %s1, 8
    %74 = vst.msk [vmem:[%s73] ss:$16 sm:$0xc] %vm70, %v69
    %v75 = vld [vmem:[#allocation0] sm:$0xf]
    %76 = vrot.lane.b32.xlu0 %v75, 119
    %v77 = vpop.permute.xlu0 %76
    %vm78 = vcmask 7168
    %s79 = scalar_lea.vmem %s1, 9
    %80 = vst.msk [vmem:[%s79] ss:$16 sm:$0x3] %vm78, %v77
    %s81 = scalar_lea.vmem %s1, 9
    %82 = vst.msk [vmem:[%s81] ss:$16 sm:$0xc] %vm78, %v77
    %v83 = vld [vmem:[#allocation0] sm:$0xf]
    %84 = vrot.lane.b32.xlu0 %v83, 118
    %v85 = vpop.permute.xlu0 %84
    %vm86 = vcmask 7168
    %s87 = scalar_lea.vmem %s1, 10
    %88 = vst.msk [vmem:[%s87] ss:$16 sm:$0x3] %vm86, %v85
    %s89 = scalar_lea.vmem %s1, 10
    %90 = vst.msk [vmem:[%s89] ss:$16 sm:$0xc] %vm86, %v85
    %v91 = vld [vmem:[#allocation0] sm:$0xf]
    %92 = vrot.lane.b32.xlu0 %v91, 117
    %v93 = vpop.permute.xlu0 %92
    %vm94 = vcmask 7168
    %s95 = scalar_lea.vmem %s1, 11
    %96 = vst.msk [vmem:[%s95] ss:$16 sm:$0x3] %vm94, %v93
    %s97 = scalar_lea.vmem %s1, 11
    %98 = vst.msk [vmem:[%s97] ss:$16 sm:$0xc] %vm94, %v93
    %v99 = vld [vmem:[#allocation0] sm:$0xf]
    %100 = vrot.lane.b32.xlu0 %v99, 116
    %v101 = vpop.permute.xlu0 %100
    %vm102 = vcmask 7168
    %s103 = scalar_lea.vmem %s1, 12
    %104 = vst.msk [vmem:[%s103] ss:$16 sm:$0x3] %vm102, %v101
    %s105 = scalar_lea.vmem %s1, 12
    %106 = vst.msk [vmem:[%s105] ss:$16 sm:$0xc] %vm102, %v101
    %v107 = vld [vmem:[#allocation0] sm:$0xf]
    %108 = vrot.lane.b32.xlu0 %v107, 115
    %v109 = vpop.permute.xlu0 %108
    %vm110 = vcmask 7168
    %s111 = scalar_lea.vmem %s1, 13
    %112 = vst.msk [vmem:[%s111] ss:$16 sm:$0x3] %vm110, %v109
    %s113 = scalar_lea.vmem %s1, 13
    %114 = vst.msk [vmem:[%s113] ss:$16 sm:$0xc] %vm110, %v109
    %v115 = vld [vmem:[#allocation0] sm:$0xf]
    %116 = vrot.lane.b32.xlu0 %v115, 114
    %v117 = vpop.permute.xlu0 %116
    %vm118 = vcmask 7168
    %s119 = scalar_lea.vmem %s1, 14
    %120 = vst.msk [vmem:[%s119] ss:$16 sm:$0x3] %vm118, %v117
    %s121 = scalar_lea.vmem %s1, 14
    %122 = vst.msk [vmem:[%s121] ss:$16 sm:$0xc] %vm118, %v117
    %v123 = vld [vmem:[#allocation0] sm:$0xf]
    %124 = vrot.lane.b32.xlu0 %v123, 113
    %v125 = vpop.permute.xlu0 %124
    %vm126 = vcmask 7168
    %s127 = scalar_lea.vmem %s1, 15
    %128 = vst.msk [vmem:[%s127] ss:$16 sm:$0x3] %vm126, %v125
    %s129 = scalar_lea.vmem %s1, 15
    %130 = vst.msk [vmem:[%s129] ss:$16 sm:$0xc] %vm126, %v125

// kernel: autoencoder_cnn_forward.7
$region0: #{autoencoder_cnn_forward.7}
  #allocation0 [shape = 'u32[]', space=smem, size = 0x4, offset = 0x4, fixed_abs, tag = 'smem constant byte address 0x4 - core index']
  #allocation1 [shape = 'u32[144,128]{1,0:T(1,128)}', space=vmem, size = 0x12000, scoped, tag = 'internal scratch']
  %s0 = inlined_call_operand.vmem [shape: f32[64,72], index: 0, kind: input, shape index: {}]
  %s1 = inlined_call_operand.vmem [shape: f32[1,72,32], index: 1, kind: input, shape index: {}]
  %s2 = inlined_call_operand.vmem [shape: f32[64,1], index: 2, kind: input, shape index: {}]
  %s3 = inlined_call_operand.vmem [shape: f32[64,32], index: 3, kind: output, shape index: {}]
  %s4 = sld [smem:[#allocation0]]
  $region22: #{autoencoder_cnn_forward.7} parent=0
    _
  %s6 = ssub.s32 1, %s4
  %s7 = scalar_select 0, %s6, %s4
  // Predicated region
  $region2: #{autoencoder_cnn_forward.7} parent=0 // pred_check
    _
  $region3: #{autoencoder_cnn_forward.7} parent=0 // pred_check_branch
    %9 = sbr.rel (0) target = $region5
  $region4: #{autoencoder_cnn_forward.7} parent=0 // pred_region
    _
  $region5: #{autoencoder_cnn_forward.7} parent=0 // pred_fallthru
    _
  // Predicated region
  $region6: #{autoencoder_cnn_forward.7} parent=0 // pred_check
    _
  $region7: #{autoencoder_cnn_forward.7} parent=0 // pred_check_branch
    %11 = sbr.rel (0) target = $region9
  $region8: #{autoencoder_cnn_forward.7} parent=0 // pred_region
    _
  $region9: #{autoencoder_cnn_forward.7} parent=0 // pred_fallthru
    _
  // Predicated region
  $region10: #{autoencoder_cnn_forward.7} parent=0 // pred_check
    _
  $region11: #{autoencoder_cnn_forward.7} parent=0 // pred_check_branch
    %13 = sbr.rel (0) target = $region13
  $region12: #{autoencoder_cnn_forward.7} parent=0 // pred_region
    _
  $region13: #{autoencoder_cnn_forward.7} parent=0 // pred_fallthru
    _
  %v14 = vld [vmem:[%s0] sm:$0xff]
  %v15 = vld [vmem:[%s0 + $0x8] sm:$0xff]
  %v16 = vld [vmem:[%s0 + $0x10] sm:$0xff]
  %v17 = vld [vmem:[%s0 + $0x18] sm:$0xff]
  %v18 = vld [vmem:[%s0 + $0x20] sm:$0xff]
  %v19 = vld [vmem:[%s0 + $0x28] sm:$0xff]
  %v20 = vld [vmem:[%s0 + $0x30] sm:$0xff]
  %v21 = vld [vmem:[%s0 + $0x38] sm:$0xff]
  %v22 = vld [vmem:[%s2] sm:$0xff]
  %v23 = vld [vmem:[%s2 + $0x8] sm:$0xff]
  %v24 = vld [vmem:[%s2 + $0x10] sm:$0xff]
  %v25 = vld [vmem:[%s2 + $0x18] sm:$0xff]
  %v26 = vld [vmem:[%s2 + $0x20] sm:$0xff]
  %v27 = vld [vmem:[%s2 + $0x28] sm:$0xff]
  %v28 = vld [vmem:[%s2 + $0x30] sm:$0xff]
  %v29 = vld [vmem:[%s2 + $0x38] sm:$0xff]
  %v30 = vld [vmem:[%s1] sm:$0xff]
  %v31 = vld [vmem:[%s1 + $0x8] sm:$0xff]
  %v32 = vld [vmem:[%s1 + $0x10] sm:$0xff]
  %v33 = vld [vmem:[%s1 + $0x18] sm:$0xff]
  %v34 = vld [vmem:[%s1 + $0x20] sm:$0xff]
  %v35 = vld [vmem:[%s1 + $0x28] sm:$0xff]
  %v36 = vld [vmem:[%s1 + $0x30] sm:$0xff]
  %v37 = vld [vmem:[%s1 + $0x38] sm:$0xff]
  %v38 = vld [vmem:[%s1 + $0x40] sm:$0xff]
  %40 = vset.pattern.permute.xlu0 0
  %41 = vperm.xlu0 %40, %v22
  %v42 = vpop.permute.xlu0 %41
  %45 = vset.pattern.permute.xlu0 0
  %46 = vperm.xlu0 %45, %v23
  %v47 = vpop.permute.xlu0 %46
  %50 = vset.pattern.permute.xlu0 0
  %51 = vperm.xlu0 %50, %v24
  %v52 = vpop.permute.xlu0 %51
  %55 = vset.pattern.permute.xlu0 0
  %56 = vperm.xlu0 %55, %v25
  %v57 = vpop.permute.xlu0 %56
  %60 = vset.pattern.permute.xlu0 0
  %61 = vperm.xlu0 %60, %v26
  %v62 = vpop.permute.xlu0 %61
  %65 = vset.pattern.permute.xlu0 0
  %66 = vperm.xlu0 %65, %v27
  %v67 = vpop.permute.xlu0 %66
  %70 = vset.pattern.permute.xlu0 0
  %71 = vperm.xlu0 %70, %v28
  %v72 = vpop.permute.xlu0 %71
  %75 = vset.pattern.permute.xlu0 0
  %76 = vperm.xlu0 %75, %v29
  %v77 = vpop.permute.xlu0 %76
  %vm79 = vcmask 588800
  %v81 = vsel %vm79, %v14, 0
  %v84 = vsel %vm79, %v15, 0
  %v87 = vsel %vm79, %v16, 0
  %v90 = vsel %vm79, %v17, 0
  %v93 = vsel %vm79, %v18, 0
  %v96 = vsel %vm79, %v19, 0
  %v99 = vsel %vm79, %v20, 0
  %v102 = vsel %vm79, %v21, 0
  %104 = vmatprep.subr.mxu0 0.0
  %105 = vmatpush1.msra.mxu0 0.0
  %106 = vmatprep.subr.mxu0 0.0
  %107 = vmatpush1.msra.mxu0 0.0
  %108 = vmatprep.subr.mxu0 0.0
  %109 = vmatpush1.msra.mxu0 0.0
  %110 = vmatprep.subr.mxu0 0.0
  %111 = vmatpush1.msra.mxu0 0.0
  %112 = vmatprep.subr.mxu0 0.0
  %113 = vmatpush1.msra.mxu0 0.0
  %114 = vmatprep.subr.mxu0 0.0
  %115 = vmatpush1.msra.mxu0 0.0
  %116 = vmatprep.subr.mxu0 0.0
  %117 = vmatpush1.msra.mxu0 0.0
  %118 = vmatprep.subr.mxu0 0.0
  %119 = vmatpush1.msra.mxu0 %v38
  %120 = vmatprep.subr.mxu0 0.0
  %121 = vmatpush1.msra.mxu0 %v37
  %122 = vmatprep.subr.mxu0 0.0
  %123 = vmatpush1.msra.mxu0 %v36
  %124 = vmatprep.subr.mxu0 0.0
  %125 = vmatpush1.msra.mxu0 %v35
  %126 = vmatprep.subr.mxu0 0.0
  %127 = vmatpush1.msra.mxu0 %v34
  %128 = vmatprep.subr.mxu0 0.0
  %129 = vmatpush1.msra.mxu0 %v33
  %130 = vmatprep.subr.mxu0 0.0
  %131 = vmatpush1.msra.mxu0 %v32
  %132 = vmatprep.subr.mxu0 0.0
  %133 = vmatpush1.msra.mxu0 %v31
  %134 = vmatprep.subr.mxu0 0.0
  %135 = vmatpush1.msra.mxu0 %v30
  %136 = vmatprep.subr.mxu0 0.0
  %137 = vmatpush2.msra.mxu0 0.0
  %138 = vmatprep.subr.mxu0 0.0
  %139 = vmatpush2.msra.mxu0 0.0
  %140 = vmatprep.subr.mxu0 0.0
  %141 = vmatpush2.msra.mxu0 0.0
  %142 = vmatprep.subr.mxu0 0.0
  %143 = vmatpush2.msra.mxu0 0.0
  %144 = vmatprep.subr.mxu0 0.0
  %145 = vmatpush2.msra.mxu0 0.0
  %146 = vmatprep.subr.mxu0 0.0
  %147 = vmatpush2.msra.mxu0 0.0
  %148 = vmatprep.subr.mxu0 0.0
  %149 = vmatpush2.msra.mxu0 0.0
  %150 = vmatprep.subr.mxu0 0.0
  %151 = vmatpush2.msra.mxu0 0.0
  %152 = vmatprep.subr.mxu0 0.0
  %153 = vmatpush2.msra.mxu0 0.0
  %154 = vmatprep.subr.mxu0 0.0
  %155 = vmatpush2.msra.mxu0 0.0
  %156 = vmatprep.subr.mxu0 0.0
  %157 = vmatpush2.msra.mxu0 0.0
  %158 = vmatprep.subr.mxu0 0.0
  %159 = vmatpush2.msra.mxu0 0.0
  %160 = vmatprep.subr.mxu0 0.0
  %161 = vmatpush2.msra.mxu0 0.0
  %162 = vmatprep.subr.mxu0 0.0
  %163 = vmatpush2.msra.mxu0 0.0
  %164 = vmatprep.subr.mxu0 0.0
  %165 = vmatpush2.msra.mxu0 0.0
  %166 = vmatprep.subr.mxu0 0.0
  %167 = vmatpush2.msra.mxu0 0.0
  %168 = vmatprep.mubr.f32.mxu0 0.0
  %169 = vmatmul.mubr.f32.gmra.mxu0 %v81
  %v170 = vpop.f32.mrf.mxu0
  %v171 = vadd.f32 %v42, %v170
  %v172 = vpop.f32.mrf.mxu0
  %173 = vmatprep.mubr.f32.mxu0 0.0
  %174 = vmatmul.mubr.f32.gmra.mxu0 %v84
  %v175 = vpop.f32.mrf.mxu0
  %v176 = vadd.f32 %v47, %v175
  %v177 = vpop.f32.mrf.mxu0
  %178 = vmatprep.mubr.f32.mxu0 0.0
  %179 = vmatmul.mubr.f32.gmra.mxu0 %v87
  %v180 = vpop.f32.mrf.mxu0
  %v181 = vadd.f32 %v52, %v180
  %v182 = vpop.f32.mrf.mxu0
  %183 = vmatprep.mubr.f32.mxu0 0.0
  %184 = vmatmul.mubr.f32.gmra.mxu0 %v90
  %v185 = vpop.f32.mrf.mxu0
  %v186 = vadd.f32 %v57, %v185
  %v187 = vpop.f32.mrf.mxu0
  %188 = vmatprep.mubr.f32.mxu0 0.0
  %189 = vmatmul.mubr.f32.gmra.mxu0 %v93
  %v190 = vpop.f32.mrf.mxu0
  %v191 = vadd.f32 %v62, %v190
  %v192 = vpop.f32.mrf.mxu0
  %193 = vmatprep.mubr.f32.mxu0 0.0
  %194 = vmatmul.mubr.f32.gmra.mxu0 %v96
  %v195 = vpop.f32.mrf.mxu0
  %v196 = vadd.f32 %v67, %v195
  %v197 = vpop.f32.mrf.mxu0
  %198 = vmatprep.mubr.f32.mxu0 0.0
  %199 = vmatmul.mubr.f32.gmra.mxu0 %v99
  %v200 = vpop.f32.mrf.mxu0
  %v201 = vadd.f32 %v72, %v200
  %v202 = vpop.f32.mrf.mxu0
  %203 = vmatprep.mubr.f32.mxu0 0.0
  %204 = vmatmul.mubr.f32.gmra.mxu0 %v102
  %v205 = vpop.f32.mrf.mxu0
  %v206 = vadd.f32 %v77, %v205
  %v207 = vpop.f32.mrf.mxu0
  %208 = vdwg.mxu0
  %v209 = vmax.f32 %v171, 0.0
  %v210 = vmax.f32 %v176, 0.0
  %v211 = vmax.f32 %v181, 0.0
  %v212 = vmax.f32 %v186, 0.0
  %v213 = vmax.f32 %v191, 0.0
  %v214 = vmax.f32 %v196, 0.0
  %v215 = vmax.f32 %v201, 0.0
  %v216 = vmax.f32 %v206, 0.0
  %vm217 = vcmask 261120
  %218 = vst.msk [vmem:[%s3] sm:$0xff] %vm217, %v209
  %219 = vst.msk [vmem:[%s3 + $0x8] sm:$0xff] %vm217, %v210
  %220 = vst.msk [vmem:[%s3 + $0x10] sm:$0xff] %vm217, %v211
  %221 = vst.msk [vmem:[%s3 + $0x18] sm:$0xff] %vm217, %v212
  %222 = vst.msk [vmem:[%s3 + $0x20] sm:$0xff] %vm217, %v213
  %223 = vst.msk [vmem:[%s3 + $0x28] sm:$0xff] %vm217, %v214
  %224 = vst.msk [vmem:[%s3 + $0x30] sm:$0xff] %vm217, %v215
  %225 = vst.msk [vmem:[%s3 + $0x38] sm:$0xff] %vm217, %v216
  // Predicated region
  $region14: #{autoencoder_cnn_forward.7} parent=0 // pred_check
    _
  $region15: #{autoencoder_cnn_forward.7} parent=0 // pred_check_branch
    %227 = sbr.rel (0) target = $region17
  $region16: #{autoencoder_cnn_forward.7} parent=0 // pred_region
    _
  $region17: #{autoencoder_cnn_forward.7} parent=0 // pred_fallthru
    _
  // Predicated region
  $region18: #{autoencoder_cnn_forward.7} parent=0 // pred_check
    _
  $region19: #{autoencoder_cnn_forward.7} parent=0 // pred_check_branch
    %229 = sbr.rel (0) target = $region21
  $region20: #{autoencoder_cnn_forward.7} parent=0 // pred_region
    _
  $region21: #{autoencoder_cnn_forward.7} parent=0 // pred_fallthru
    _

// kernel: tile.18
$region0: #{tile.18}
  #allocation0 [shape = 's32[1]{0}', space=sflag, size = 0x4, scoped, tag = 'scoped memory for tile.18']
  %s0 = inlined_call_operand.vmem [shape: f32[8], index: 0, kind: input, shape index: {}]
  %s1 = inlined_call_operand.vmem [shape: f32[4,8], index: 1, kind: output, shape index: {}]
  // Predicated region
  $region2: #{tile.18} parent=0 // pred_check
    _
  $region3: #{tile.18} parent=0 // pred_check_branch
    %3 = sbr.rel (0) target = $region5
  $region4: #{tile.18} parent=0 // pred_region
    _
  $region5: #{tile.18} parent=0 // pred_fallthru
    _
  %v4 = vld [vmem:[%s0] ss:$0 sm:$0xff]
  %5 = vst [vmem:[%s1] sm:$0xf] %v4

// kernel: tile.1
$region0: #{tile.1}
  %s0 = inlined_call_operand.vmem [shape: f32[4,8], index: 0, kind: input, shape index: {}]
  %s1 = inlined_call_operand.vmem [shape: f32[32,1], index: 1, kind: output, shape index: {}]
  $region1: #{tile.1} parent=0
    #allocation0 [shape = 'u8[4096]{0}', space=vmem, size = 0x1000, scoped, tag = 'scoped mem for input reshape']
    %s3 = sshll.u32 1, 4
    %s4 = ssub.s32 %s3, 1
    %v5 = vld [vmem:[%s0] sm:%s4]
    %6 = vst [vmem:[#allocation0] sm:%s4] %v5
    %v7 = vld [vmem:[#allocation0] sm:$0xf]
    %vm8 = vcmask 7168
    %9 = vst.msk [vmem:[%s1] ss:$8 sm:$0xf] %vm8, %v7
    %v10 = vld [vmem:[#allocation0] sm:$0xf]
    %11 = vrot.lane.b32.xlu0 %v10, 127
    %v12 = vpop.permute.xlu0 %11
    %vm13 = vcmask 7168
    %s14 = scalar_lea.vmem %s1, 1
    %15 = vst.msk [vmem:[%s14] ss:$8 sm:$0xf] %vm13, %v12
    %v16 = vld [vmem:[#allocation0] sm:$0xf]
    %17 = vrot.lane.b32.xlu0 %v16, 126
    %v18 = vpop.permute.xlu0 %17
    %vm19 = vcmask 7168
    %s20 = scalar_lea.vmem %s1, 2
    %21 = vst.msk [vmem:[%s20] ss:$8 sm:$0xf] %vm19, %v18
    %v22 = vld [vmem:[#allocation0] sm:$0xf]
    %23 = vrot.lane.b32.xlu0 %v22, 125
    %v24 = vpop.permute.xlu0 %23
    %vm25 = vcmask 7168
    %s26 = scalar_lea.vmem %s1, 3
    %27 = vst.msk [vmem:[%s26] ss:$8 sm:$0xf] %vm25, %v24
    %v28 = vld [vmem:[#allocation0] sm:$0xf]
    %29 = vrot.lane.b32.xlu0 %v28, 124
    %v30 = vpop.permute.xlu0 %29
    %vm31 = vcmask 7168
    %s32 = scalar_lea.vmem %s1, 4
    %33 = vst.msk [vmem:[%s32] ss:$8 sm:$0xf] %vm31, %v30
    %v34 = vld [vmem:[#allocation0] sm:$0xf]
    %35 = vrot.lane.b32.xlu0 %v34, 123
    %v36 = vpop.permute.xlu0 %35
    %vm37 = vcmask 7168
    %s38 = scalar_lea.vmem %s1, 5
    %39 = vst.msk [vmem:[%s38] ss:$8 sm:$0xf] %vm37, %v36
    %v40 = vld [vmem:[#allocation0] sm:$0xf]
    %41 = vrot.lane.b32.xlu0 %v40, 122
    %v42 = vpop.permute.xlu0 %41
    %vm43 = vcmask 7168
    %s44 = scalar_lea.vmem %s1, 6
    %45 = vst.msk [vmem:[%s44] ss:$8 sm:$0xf] %vm43, %v42
    %v46 = vld [vmem:[#allocation0] sm:$0xf]
    %47 = vrot.lane.b32.xlu0 %v46, 121
    %v48 = vpop.permute.xlu0 %47
    %vm49 = vcmask 7168
    %s50 = scalar_lea.vmem %s1, 7
    %51 = vst.msk [vmem:[%s50] ss:$8 sm:$0xf] %vm49, %v48

// kernel: autoencoder_cnn_forward.8
$region0: #{autoencoder_cnn_forward.8}
  #allocation0 [shape = 'u32[]', space=smem, size = 0x4, offset = 0x4, fixed_abs, tag = 'smem constant byte address 0x4 - core index']
  #allocation1 [shape = 'u32[144,128]{1,0:T(1,128)}', space=vmem, size = 0x12000, scoped, tag = 'internal scratch']
  %s0 = inlined_call_operand.vmem [shape: f32[32,144], index: 0, kind: input, shape index: {}]
  %s1 = inlined_call_operand.vmem [shape: f32[1,144,128], index: 1, kind: input, shape index: {}]
  %s2 = inlined_call_operand.vmem [shape: f32[32,1], index: 2, kind: input, shape index: {}]
  %s3 = inlined_call_operand.vmem [shape: f32[32,128], index: 3, kind: output, shape index: {}]
  %s4 = sld [smem:[#allocation0]]
  $region22: #{autoencoder_cnn_forward.8} parent=0
    _
  %s6 = ssub.s32 1, %s4
  %s7 = scalar_select 0, %s6, %s4
  // Predicated region
  $region2: #{autoencoder_cnn_forward.8} parent=0 // pred_check
    _
  $region3: #{autoencoder_cnn_forward.8} parent=0 // pred_check_branch
    %9 = sbr.rel (0) target = $region5
  $region4: #{autoencoder_cnn_forward.8} parent=0 // pred_region
    _
  $region5: #{autoencoder_cnn_forward.8} parent=0 // pred_fallthru
    _
  // Predicated region
  $region6: #{autoencoder_cnn_forward.8} parent=0 // pred_check
    _
  $region7: #{autoencoder_cnn_forward.8} parent=0 // pred_check_branch
    %11 = sbr.rel (0) target = $region9
  $region8: #{autoencoder_cnn_forward.8} parent=0 // pred_region
    _
  $region9: #{autoencoder_cnn_forward.8} parent=0 // pred_fallthru
    _
  // Predicated region
  $region10: #{autoencoder_cnn_forward.8} parent=0 // pred_check
    _
  $region11: #{autoencoder_cnn_forward.8} parent=0 // pred_check_branch
    %13 = sbr.rel (0) target = $region13
  $region12: #{autoencoder_cnn_forward.8} parent=0 // pred_region
    _
  $region13: #{autoencoder_cnn_forward.8} parent=0 // pred_fallthru
    _
  %v14 = vld [vmem:[%s0] sm:$0xff]
  %v15 = vld [vmem:[%s0 + $0x8] sm:$0xff]
  %v16 = vld [vmem:[%s0 + $0x10] sm:$0xff]
  %v17 = vld [vmem:[%s0 + $0x18] sm:$0xff]
  %v18 = vld [vmem:[%s0 + $0x20] sm:$0xff]
  %v19 = vld [vmem:[%s0 + $0x28] sm:$0xff]
  %v20 = vld [vmem:[%s0 + $0x30] sm:$0xff]
  %v21 = vld [vmem:[%s0 + $0x38] sm:$0xff]
  %v22 = vld [vmem:[%s2] sm:$0xff]
  %v23 = vld [vmem:[%s2 + $0x8] sm:$0xff]
  %v24 = vld [vmem:[%s2 + $0x10] sm:$0xff]
  %v25 = vld [vmem:[%s2 + $0x18] sm:$0xff]
  %v26 = vld [vmem:[%s1] sm:$0xff]
  %v27 = vld [vmem:[%s1 + $0x8] sm:$0xff]
  %v28 = vld [vmem:[%s1 + $0x10] sm:$0xff]
  %v29 = vld [vmem:[%s1 + $0x18] sm:$0xff]
  %v30 = vld [vmem:[%s1 + $0x20] sm:$0xff]
  %v31 = vld [vmem:[%s1 + $0x28] sm:$0xff]
  %v32 = vld [vmem:[%s1 + $0x30] sm:$0xff]
  %v33 = vld [vmem:[%s1 + $0x38] sm:$0xff]
  %v34 = vld [vmem:[%s1 + $0x40] sm:$0xff]
  %v35 = vld [vmem:[%s1 + $0x48] sm:$0xff]
  %v36 = vld [vmem:[%s1 + $0x50] sm:$0xff]
  %v37 = vld [vmem:[%s1 + $0x58] sm:$0xff]
  %v38 = vld [vmem:[%s1 + $0x60] sm:$0xff]
  %v39 = vld [vmem:[%s1 + $0x68] sm:$0xff]
  %v40 = vld [vmem:[%s1 + $0x70] sm:$0xff]
  %v41 = vld [vmem:[%s1 + $0x78] sm:$0xff]
  %v42 = vld [vmem:[%s1 + $0x80] sm:$0xff]
  %v43 = vld [vmem:[%s1 + $0x88] sm:$0xff]
  %45 = vset.pattern.permute.xlu0 0
  %46 = vperm.xlu0 %45, %v22
  %v47 = vpop.permute.xlu0 %46
  %50 = vset.pattern.permute.xlu0 0
  %51 = vperm.xlu0 %50, %v23
  %v52 = vpop.permute.xlu0 %51
  %55 = vset.pattern.permute.xlu0 0
  %56 = vperm.xlu0 %55, %v24
  %v57 = vpop.permute.xlu0 %56
  %60 = vset.pattern.permute.xlu0 0
  %61 = vperm.xlu0 %60, %v25
  %v62 = vpop.permute.xlu0 %61
  %vm64 = vcmask 130048
  %v66 = vsel %vm64, %v15, 0
  %v69 = vsel %vm64, %v17, 0
  %v72 = vsel %vm64, %v19, 0
  %v75 = vsel %vm64, %v21, 0
  %77 = vmatprep.subr.mxu0 0.0
  %78 = vmatpush1.msra.mxu0 %v41
  %79 = vmatprep.subr.mxu0 0.0
  %80 = vmatpush1.msra.mxu0 %v40
  %81 = vmatprep.subr.mxu0 0.0
  %82 = vmatpush1.msra.mxu0 %v39
  %83 = vmatprep.subr.mxu0 0.0
  %84 = vmatpush1.msra.mxu0 %v38
  %85 = vmatprep.subr.mxu0 0.0
  %86 = vmatpush1.msra.mxu0 %v37
  %87 = vmatprep.subr.mxu0 0.0
  %88 = vmatpush1.msra.mxu0 %v36
  %89 = vmatprep.subr.mxu0 0.0
  %90 = vmatpush1.msra.mxu0 %v35
  %91 = vmatprep.subr.mxu0 0.0
  %92 = vmatpush1.msra.mxu0 %v34
  %93 = vmatprep.subr.mxu0 0.0
  %94 = vmatpush1.msra.mxu0 %v33
  %95 = vmatprep.subr.mxu0 0.0
  %96 = vmatpush1.msra.mxu0 %v32
  %97 = vmatprep.subr.mxu0 0.0
  %98 = vmatpush1.msra.mxu0 %v31
  %99 = vmatprep.subr.mxu0 0.0
  %100 = vmatpush1.msra.mxu0 %v30
  %101 = vmatprep.subr.mxu0 0.0
  %102 = vmatpush1.msra.mxu0 %v29
  %103 = vmatprep.subr.mxu0 0.0
  %104 = vmatpush1.msra.mxu0 %v28
  %105 = vmatprep.subr.mxu0 0.0
  %106 = vmatpush1.msra.mxu0 %v27
  %107 = vmatprep.subr.mxu0 0.0
  %108 = vmatpush1.msra.mxu0 %v26
  %109 = vmatprep.subr.mxu0 0.0
  %110 = vmatpush2.msra.mxu0 0.0
  %111 = vmatprep.subr.mxu0 0.0
  %112 = vmatpush2.msra.mxu0 0.0
  %113 = vmatprep.subr.mxu0 0.0
  %114 = vmatpush2.msra.mxu0 0.0
  %115 = vmatprep.subr.mxu0 0.0
  %116 = vmatpush2.msra.mxu0 0.0
  %117 = vmatprep.subr.mxu0 0.0
  %118 = vmatpush2.msra.mxu0 0.0
  %119 = vmatprep.subr.mxu0 0.0
  %120 = vmatpush2.msra.mxu0 0.0
  %121 = vmatprep.subr.mxu0 0.0
  %122 = vmatpush2.msra.mxu0 0.0
  %123 = vmatprep.subr.mxu0 0.0
  %124 = vmatpush2.msra.mxu0 0.0
  %125 = vmatprep.subr.mxu0 0.0
  %126 = vmatpush2.msra.mxu0 0.0
  %127 = vmatprep.subr.mxu0 0.0
  %128 = vmatpush2.msra.mxu0 0.0
  %129 = vmatprep.subr.mxu0 0.0
  %130 = vmatpush2.msra.mxu0 0.0
  %131 = vmatprep.subr.mxu0 0.0
  %132 = vmatpush2.msra.mxu0 0.0
  %133 = vmatprep.subr.mxu0 0.0
  %134 = vmatpush2.msra.mxu0 0.0
  %135 = vmatprep.subr.mxu0 0.0
  %136 = vmatpush2.msra.mxu0 0.0
  %137 = vmatprep.subr.mxu0 0.0
  %138 = vmatpush2.msra.mxu0 %v43
  %139 = vmatprep.subr.mxu0 0.0
  %140 = vmatpush2.msra.mxu0 %v42
  %141 = vmatprep.mubr.f32.mxu0 %v66
  %142 = vmatmul.mubr.f32.gmra.mxu0 %v14
  %v143 = vpop.f32.mrf.mxu0
  %v144 = vadd.f32 %v47, %v143
  %v145 = vpop.f32.mrf.mxu0
  %146 = vmatprep.mubr.f32.mxu0 %v69
  %147 = vmatmul.mubr.f32.gmra.mxu0 %v16
  %v148 = vpop.f32.mrf.mxu0
  %v149 = vadd.f32 %v52, %v148
  %v150 = vpop.f32.mrf.mxu0
  %151 = vmatprep.mubr.f32.mxu0 %v72
  %152 = vmatmul.mubr.f32.gmra.mxu0 %v18
  %v153 = vpop.f32.mrf.mxu0
  %v154 = vadd.f32 %v57, %v153
  %v155 = vpop.f32.mrf.mxu0
  %156 = vmatprep.mubr.f32.mxu0 %v75
  %157 = vmatmul.mubr.f32.gmra.mxu0 %v20
  %v158 = vpop.f32.mrf.mxu0
  %v159 = vadd.f32 %v62, %v158
  %v160 = vpop.f32.mrf.mxu0
  %161 = vdwg.mxu0
  %v162 = vmax.f32 %v144, 0.0
  %v163 = vmax.f32 %v149, 0.0
  %v164 = vmax.f32 %v154, 0.0
  %v165 = vmax.f32 %v159, 0.0
  %166 = vst [vmem:[%s3] sm:$0xff] %v162
  %167 = vst [vmem:[%s3 + $0x8] sm:$0xff] %v163
  %168 = vst [vmem:[%s3 + $0x10] sm:$0xff] %v164
  %169 = vst [vmem:[%s3 + $0x18] sm:$0xff] %v165
  // Predicated region
  $region14: #{autoencoder_cnn_forward.8} parent=0 // pred_check
    _
  $region15: #{autoencoder_cnn_forward.8} parent=0 // pred_check_branch
    %171 = sbr.rel (0) target = $region17
  $region16: #{autoencoder_cnn_forward.8} parent=0 // pred_region
    _
  $region17: #{autoencoder_cnn_forward.8} parent=0 // pred_fallthru
    _
  // Predicated region
  $region18: #{autoencoder_cnn_forward.8} parent=0 // pred_check
    _
  $region19: #{autoencoder_cnn_forward.8} parent=0 // pred_check_branch
    %173 = sbr.rel (0) target = $region21
  $region20: #{autoencoder_cnn_forward.8} parent=0 // pred_region
    _
  $region21: #{autoencoder_cnn_forward.8} parent=0 // pred_fallthru
    _

// kernel: autoencoder_cnn_forward.9
$region0: #{autoencoder_cnn_forward.9}
  #allocation0 [shape = 'u32[]', space=smem, size = 0x4, offset = 0x4, fixed_abs, tag = 'smem constant byte address 0x4 - core index']
  #allocation1 [shape = 'u32[144,128]{1,0:T(1,128)}', space=vmem, size = 0x12000, scoped, tag = 'internal scratch']
  #allocation2 [shape = 'f32[1,1]{1,0:T(1,128)S(1)}', space=vmem, size = 0x200, scoped, tag = 'scoped memory for autoencoder_cnn_forward.9']
  %s0 = inlined_call_operand.vmem [shape: f32[1,72], index: 0, kind: input, shape index: {}]
  %s1 = inlined_call_operand.vmem [shape: f32[1,72,512], index: 1, kind: input, shape index: {}]
  %s2 = inlined_call_operand.<no memory space> [shape: f32[1,1], index: 2, kind: input, shape index: {}]
  %s3 = inlined_call_operand.vmem [shape: f32[1,512], index: 3, kind: output, shape index: {}]
  %s4 = sld [smem:[#allocation0]]
  $region22: #{autoencoder_cnn_forward.9} parent=0
    _
  %s6 = ssub.s32 1, %s4
  %s7 = scalar_select 0, %s6, %s4
  %v8 = vstv %s2
  %9 = vst [vmem:[#allocation2] sm:$0x1] %v8
  // Predicated region
  $region2: #{autoencoder_cnn_forward.9} parent=0 // pred_check
    _
  $region3: #{autoencoder_cnn_forward.9} parent=0 // pred_check_branch
    %11 = sbr.rel (0) target = $region5
  $region4: #{autoencoder_cnn_forward.9} parent=0 // pred_region
    _
  $region5: #{autoencoder_cnn_forward.9} parent=0 // pred_fallthru
    _
  // Predicated region
  $region6: #{autoencoder_cnn_forward.9} parent=0 // pred_check
    _
  $region7: #{autoencoder_cnn_forward.9} parent=0 // pred_check_branch
    %13 = sbr.rel (0) target = $region9
  $region8: #{autoencoder_cnn_forward.9} parent=0 // pred_region
    _
  $region9: #{autoencoder_cnn_forward.9} parent=0 // pred_fallthru
    _
  // Predicated region
  $region10: #{autoencoder_cnn_forward.9} parent=0 // pred_check
    _
  $region11: #{autoencoder_cnn_forward.9} parent=0 // pred_check_branch
    %15 = sbr.rel (0) target = $region13
  $region12: #{autoencoder_cnn_forward.9} parent=0 // pred_region
    _
  $region13: #{autoencoder_cnn_forward.9} parent=0 // pred_fallthru
    _
  %v16 = vld [vmem:[%s0] sm:$0x1]
  %v17 = vld [vmem:[#allocation2] sm:$0x1]
  %v18 = vld [vmem:[%s1] sm:$0xff]
  %v19 = vld [vmem:[%s1 + $0x8] sm:$0xff]
  %v20 = vld [vmem:[%s1 + $0x10] sm:$0xff]
  %v21 = vld [vmem:[%s1 + $0x18] sm:$0xff]
  %v22 = vld [vmem:[%s1 + $0x20] sm:$0xff]
  %v23 = vld [vmem:[%s1 + $0x28] sm:$0xff]
  %v24 = vld [vmem:[%s1 + $0x30] sm:$0xff]
  %v25 = vld [vmem:[%s1 + $0x38] sm:$0xff]
  %v26 = vld [vmem:[%s1 + $0x40] sm:$0xff]
  %v27 = vld [vmem:[%s1 + $0x48] sm:$0xff]
  %v28 = vld [vmem:[%s1 + $0x50] sm:$0xff]
  %v29 = vld [vmem:[%s1 + $0x58] sm:$0xff]
  %v30 = vld [vmem:[%s1 + $0x60] sm:$0xff]
  %v31 = vld [vmem:[%s1 + $0x68] sm:$0xff]
  %v32 = vld [vmem:[%s1 + $0x70] sm:$0xff]
  %v33 = vld [vmem:[%s1 + $0x78] sm:$0xff]
  %v34 = vld [vmem:[%s1 + $0x80] sm:$0xff]
  %v35 = vld [vmem:[%s1 + $0x88] sm:$0xff]
  %v36 = vld [vmem:[%s1 + $0x90] sm:$0xff]
  %v37 = vld [vmem:[%s1 + $0x98] sm:$0xff]
  %v38 = vld [vmem:[%s1 + $0xa0] sm:$0xff]
  %v39 = vld [vmem:[%s1 + $0xa8] sm:$0xff]
  %v40 = vld [vmem:[%s1 + $0xb0] sm:$0xff]
  %v41 = vld [vmem:[%s1 + $0xb8] sm:$0xff]
  %v42 = vld [vmem:[%s1 + $0xc0] sm:$0xff]
  %v43 = vld [vmem:[%s1 + $0xc8] sm:$0xff]
  %v44 = vld [vmem:[%s1 + $0xd0] sm:$0xff]
  %v45 = vld [vmem:[%s1 + $0xd8] sm:$0xff]
  %v46 = vld [vmem:[%s1 + $0xe0] sm:$0xff]
  %v47 = vld [vmem:[%s1 + $0xe8] sm:$0xff]
  %v48 = vld [vmem:[%s1 + $0xf0] sm:$0xff]
  %v49 = vld [vmem:[%s1 + $0xf8] sm:$0xff]
  %v50 = vld [vmem:[%s1 + $0x100] sm:$0xff]
  %v51 = vld [vmem:[%s1 + $0x108] sm:$0xff]
  %v52 = vld [vmem:[%s1 + $0x110] sm:$0xff]
  %v53 = vld [vmem:[%s1 + $0x118] sm:$0xff]
  %55 = vset.pattern.permute.xlu0 0
  %56 = vperm.xlu0 %55, %v17
  %v57 = vpop.permute.xlu0 %56
  %v59 = vlaneseq
  %v60 = vshrl.u32 %v59, 7
  %v61 = vsub.s32 0, %v60
  %v62 = vrot.slane %v57, %v61
  %vm63 = vcmask 588800
  %v65 = vsel %vm63, %v16, 0
  %67 = vmatprep.subr.mxu0 0.0
  %68 = vmatpush1.msra.mxu0 0.0
  %69 = vmatprep.subr.mxu0 0.0
  %70 = vmatpush1.msra.mxu0 0.0
  %71 = vmatprep.subr.mxu0 0.0
  %72 = vmatpush1.msra.mxu0 0.0
  %73 = vmatprep.subr.mxu0 0.0
  %74 = vmatpush1.msra.mxu0 0.0
  %75 = vmatprep.subr.mxu0 0.0
  %76 = vmatpush1.msra.mxu0 0.0
  %77 = vmatprep.subr.mxu0 0.0
  %78 = vmatpush1.msra.mxu0 0.0
  %79 = vmatprep.subr.mxu0 0.0
  %80 = vmatpush1.msra.mxu0 0.0
  %81 = vmatprep.subr.mxu0 %v51
  %82 = vmatpush1.msra.mxu0 %v50
  %83 = vmatprep.subr.mxu0 %v47
  %84 = vmatpush1.msra.mxu0 %v46
  %85 = vmatprep.subr.mxu0 %v43
  %86 = vmatpush1.msra.mxu0 %v42
  %87 = vmatprep.subr.mxu0 %v39
  %88 = vmatpush1.msra.mxu0 %v38
  %89 = vmatprep.subr.mxu0 %v35
  %90 = vmatpush1.msra.mxu0 %v34
  %91 = vmatprep.subr.mxu0 %v31
  %92 = vmatpush1.msra.mxu0 %v30
  %93 = vmatprep.subr.mxu0 %v27
  %94 = vmatpush1.msra.mxu0 %v26
  %95 = vmatprep.subr.mxu0 %v23
  %96 = vmatpush1.msra.mxu0 %v22
  %97 = vmatprep.subr.mxu0 %v19
  %98 = vmatpush1.msra.mxu0 %v18
  %99 = vmatprep.subr.mxu0 0.0
  %100 = vmatpush2.msra.mxu0 0.0
  %101 = vmatprep.subr.mxu0 0.0
  %102 = vmatpush2.msra.mxu0 0.0
  %103 = vmatprep.subr.mxu0 0.0
  %104 = vmatpush2.msra.mxu0 0.0
  %105 = vmatprep.subr.mxu0 0.0
  %106 = vmatpush2.msra.mxu0 0.0
  %107 = vmatprep.subr.mxu0 0.0
  %108 = vmatpush2.msra.mxu0 0.0
  %109 = vmatprep.subr.mxu0 0.0
  %110 = vmatpush2.msra.mxu0 0.0
  %111 = vmatprep.subr.mxu0 0.0
  %112 = vmatpush2.msra.mxu0 0.0
  %113 = vmatprep.subr.mxu0 0.0
  %114 = vmatpush2.msra.mxu0 0.0
  %115 = vmatprep.subr.mxu0 0.0
  %116 = vmatpush2.msra.mxu0 0.0
  %117 = vmatprep.subr.mxu0 0.0
  %118 = vmatpush2.msra.mxu0 0.0
  %119 = vmatprep.subr.mxu0 0.0
  %120 = vmatpush2.msra.mxu0 0.0
  %121 = vmatprep.subr.mxu0 0.0
  %122 = vmatpush2.msra.mxu0 0.0
  %123 = vmatprep.subr.mxu0 0.0
  %124 = vmatpush2.msra.mxu0 0.0
  %125 = vmatprep.subr.mxu0 0.0
  %126 = vmatpush2.msra.mxu0 0.0
  %127 = vmatprep.subr.mxu0 0.0
  %128 = vmatpush2.msra.mxu0 0.0
  %129 = vmatprep.subr.mxu0 0.0
  %130 = vmatpush2.msra.mxu0 0.0
  %131 = vmatprep.mubr.f32.mxu0 0.0
  %132 = vmatmul.mubr.f32.gmra.mxu0 %v65
  %v133 = vpop.f32.mrf.mxu0
  %v134 = vadd.f32 %v62, %v133
  %v135 = vpop.f32.mrf.mxu0
  %v136 = vadd.f32 %v62, %v135
  %137 = vdwg.mxu0
  %138 = vmatprep.subr.mxu0 0.0
  %139 = vmatpush1.msra.mxu0 0.0
  %140 = vmatprep.subr.mxu0 0.0
  %141 = vmatpush1.msra.mxu0 0.0
  %142 = vmatprep.subr.mxu0 0.0
  %143 = vmatpush1.msra.mxu0 0.0
  %144 = vmatprep.subr.mxu0 0.0
  %145 = vmatpush1.msra.mxu0 0.0
  %146 = vmatprep.subr.mxu0 0.0
  %147 = vmatpush1.msra.mxu0 0.0
  %148 = vmatprep.subr.mxu0 0.0
  %149 = vmatpush1.msra.mxu0 0.0
  %150 = vmatprep.subr.mxu0 0.0
  %151 = vmatpush1.msra.mxu0 0.0
  %152 = vmatprep.subr.mxu0 %v53
  %153 = vmatpush1.msra.mxu0 %v52
  %154 = vmatprep.subr.mxu0 %v49
  %155 = vmatpush1.msra.mxu0 %v48
  %156 = vmatprep.subr.mxu0 %v45
  %157 = vmatpush1.msra.mxu0 %v44
  %158 = vmatprep.subr.mxu0 %v41
  %159 = vmatpush1.msra.mxu0 %v40
  %160 = vmatprep.subr.mxu0 %v37
  %161 = vmatpush1.msra.mxu0 %v36
  %162 = vmatprep.subr.mxu0 %v33
  %163 = vmatpush1.msra.mxu0 %v32
  %164 = vmatprep.subr.mxu0 %v29
  %165 = vmatpush1.msra.mxu0 %v28
  %166 = vmatprep.subr.mxu0 %v25
  %167 = vmatpush1.msra.mxu0 %v24
  %168 = vmatprep.subr.mxu0 %v21
  %169 = vmatpush1.msra.mxu0 %v20
  %170 = vmatprep.subr.mxu0 0.0
  %171 = vmatpush2.msra.mxu0 0.0
  %172 = vmatprep.subr.mxu0 0.0
  %173 = vmatpush2.msra.mxu0 0.0
  %174 = vmatprep.subr.mxu0 0.0
  %175 = vmatpush2.msra.mxu0 0.0
  %176 = vmatprep.subr.mxu0 0.0
  %177 = vmatpush2.msra.mxu0 0.0
  %178 = vmatprep.subr.mxu0 0.0
  %179 = vmatpush2.msra.mxu0 0.0
  %180 = vmatprep.subr.mxu0 0.0
  %181 = vmatpush2.msra.mxu0 0.0
  %182 = vmatprep.subr.mxu0 0.0
  %183 = vmatpush2.msra.mxu0 0.0
  %184 = vmatprep.subr.mxu0 0.0
  %185 = vmatpush2.msra.mxu0 0.0
  %186 = vmatprep.subr.mxu0 0.0
  %187 = vmatpush2.msra.mxu0 0.0
  %188 = vmatprep.subr.mxu0 0.0
  %189 = vmatpush2.msra.mxu0 0.0
  %190 = vmatprep.subr.mxu0 0.0
  %191 = vmatpush2.msra.mxu0 0.0
  %192 = vmatprep.subr.mxu0 0.0
  %193 = vmatpush2.msra.mxu0 0.0
  %194 = vmatprep.subr.mxu0 0.0
  %195 = vmatpush2.msra.mxu0 0.0
  %196 = vmatprep.subr.mxu0 0.0
  %197 = vmatpush2.msra.mxu0 0.0
  %198 = vmatprep.subr.mxu0 0.0
  %199 = vmatpush2.msra.mxu0 0.0
  %200 = vmatprep.subr.mxu0 0.0
  %201 = vmatpush2.msra.mxu0 0.0
  %202 = vmatprep.mubr.f32.mxu0 0.0
  %203 = vmatmul.mubr.f32.gmra.mxu0 %v65
  %v204 = vpop.f32.mrf.mxu0
  %v205 = vadd.f32 %v62, %v204
  %v206 = vpop.f32.mrf.mxu0
  %v207 = vadd.f32 %v62, %v206
  %208 = vdwg.mxu0
  %v209 = vtanh.pop %v134
  %v210 = vtanh.pop %v136
  %v211 = vtanh.pop %v205
  %v212 = vtanh.pop %v207
  %v217 = vcombine.low %v209, %v210
  %v218 = vcombine.low %v211, %v212
  %v220 = vunpack.c.l.s4 1966171168
  %v221 = vunpack.c.0.s8 %v220
  %v222 = vlaneseq
  %v223 = vshrl.u32 %v222, 7
  %v224 = vsub.s32 %v221, %v223
  %v225 = vrot.slane %v217, %v224
  %v227 = vunpack.c.l.s4 1966171168
  %v228 = vunpack.c.0.s8 %v227
  %v229 = vlaneseq
  %v230 = vshrl.u32 %v229, 7
  %v231 = vsub.s32 %v228, %v230
  %v232 = vrot.slane %v218, %v231
  %v233 = vcombine.low %v225, %v232
  %v235 = vunpack.c.l.s4 1966171168
  %v236 = vunpack.c.0.s8 %v235
  %v237 = vlaneseq
  %v238 = vshrl.u32 %v237, 7
  %v239 = vsub.s32 %v236, %v238
  %v240 = vrot.slane %v233, %v239
  %v242 = vlaneseq
  %vm243 = vcmp.ge.s32.totalorder %v242, 0
  %vm244 = vcmp.lt.s32.totalorder %v242, 512
  %vm245 = vmand %vm243, %vm244
  %246 = vst.msk [vmem:[%s3] sm:$0xf] %vm245, %v240
  // Predicated region
  $region14: #{autoencoder_cnn_forward.9} parent=0 // pred_check
    _
  $region15: #{autoencoder_cnn_forward.9} parent=0 // pred_check_branch
    %248 = sbr.rel (0) target = $region17
  $region16: #{autoencoder_cnn_forward.9} parent=0 // pred_region
    _
  $region17: #{autoencoder_cnn_forward.9} parent=0 // pred_fallthru
    _
  // Predicated region
  $region18: #{autoencoder_cnn_forward.9} parent=0 // pred_check
    _
  $region19: #{autoencoder_cnn_forward.9} parent=0 // pred_check_branch
    %250 = sbr.rel (0) target = $region21
  $region20: #{autoencoder_cnn_forward.9} parent=0 // pred_region
    _
  $region21: #{autoencoder_cnn_forward.9} parent=0 // pred_fallthru
    _

</llo_original>
